<compile_context>
chip_gen: v7x
topology: tpu7x:2x2x1
jax: 0.10.0
libtpu: 0.0.40
codegen_flags: <defaults>
</compile_context>

<pallas_src>
import jax
import jax.numpy as jnp
from jax.experimental import pallas as pl
from jax.experimental.pallas import tpu as pltpu


# -----------------------------------------------------------------------------
# Kernel
# -----------------------------------------------------------------------------
def net_kernel(x_ref,
               wbd_ref, bbd_ref,     # fused hidden3|hidden2 (block-diag, permuted cols)
               w4p_ref, b4_ref,      # hidden4 with input-gather folded into rows
               w5z_ref, b5z_ref,     # hidden5 with permuted output cols
               w6bd_ref, b6bd_ref,   # hidden6 block-diag [128, 1792] (applied to x_in6|x_in7)
               out6_ref, out7_ref):
    # Input tile stays f32 in HBM; cast once to bf16 for the MXU.
    x = x_ref[...].astype(jnp.bfloat16)              # [bt, 784] bf16

    def relu_mm(a_bf16, w_ref, b_ref):
        acc = jnp.dot(a_bf16, w_ref[...], preferred_element_type=jnp.float32)
        return jnp.maximum(acc + b_ref[...], 0.0)     # f32 accumulate + bias + relu

    # Stage 1: c = [ x_out3[:,32:64] | x_out2[:,32:64] | x_out3[:,0:32] | x_out2[:,0:32] ]
    c = relu_mm(x, wbd_ref, bbd_ref)                  # [bt, 128] f32

    # Stage 2: hidden4 — the x_in4 gather is baked into zero-padded weight rows.
    h4 = relu_mm(c.astype(jnp.bfloat16), w4p_ref, b4_ref)    # [bt, 32] f32

    # Stage 3: hidden5 with permuted output columns:
    #   h5[:, 0:32]   = x_out5[:, 32:64]   (= x_in6_1)
    #   h5[:, 96:128] = x_out5[:, 0:32]    (= x_in7_2)
    # Middle 64 lanes are replaced by passthrough from `c` (pure per-lane
    # select, no lane crossing):
    #   c[:, 32:64] = x_out2[:, 32:64] (= x_in6_2),  c[:, 64:96] = x_out3[:, 0:32] (= x_in7_1)
    h5 = relu_mm(h4.astype(jnp.bfloat16), w5z_ref, b5z_ref)  # [bt, 128] f32
    lane = jax.lax.broadcasted_iota(jnp.int32, (1, 128), 1)  # 1 row, broadcasts in where
    mid = (lane >= 32) & (lane < 96)
    z = jnp.where(mid, c, h5)          # z[:, :64] == x_in6, z[:, 64:] == x_in7  [bt,128] f32

    # Stage 4: ONE lane-dense hidden6 matmul for both outputs via a
    # block-diagonal [128, 1792] weight (out6 cols 0:784, out7 cols 896:1680).
    y = relu_mm(z.astype(jnp.bfloat16), w6bd_ref, b6bd_ref)  # [bt, 1792] f32

    out6_ref[...] = y[:, 0:784].astype(out6_ref.dtype)
    out7_ref[...] = y[:, 896:1680].astype(out7_ref.dtype)


# -----------------------------------------------------------------------------
# Weight folding (pure JAX, done in the wrapper — rebuilt whenever params change)
# -----------------------------------------------------------------------------
def fold_params(p):
    f32, bf16 = jnp.float32, jnp.bfloat16
    w2, b2 = p["w2"].astype(f32), p["b2"].astype(f32)   # [392,64], [1,64]
    w3, b3 = p["w3"].astype(f32), p["b3"].astype(f32)   # [392,64], [1,64]
    w4, b4 = p["w4"].astype(f32), p["b4"].astype(f32)   # [64,32],  [1,32]
    w5, b5 = p["w5"].astype(f32), p["b5"].astype(f32)   # [32,64],  [1,64]
    w6, b6 = p["w6"].astype(f32), p["b6"].astype(f32)   # [64,784], [1,784]

    # Stage-1: block-diagonal hidden3|hidden2 with permuted output columns.
    wbd = jnp.zeros((784, 128), f32)
    wbd = wbd.at[0:392,   0:32  ].set(w3[:, 32:64])   # c[:,  0:32 ] = x_out3[:,32:64]
    wbd = wbd.at[392:784, 32:64 ].set(w2[:, 32:64])   # c[:, 32:64 ] = x_out2[:,32:64]
    wbd = wbd.at[0:392,   64:96 ].set(w3[:, 0:32])    # c[:, 64:96 ] = x_out3[:, 0:32]
    wbd = wbd.at[392:784, 96:128].set(w2[:, 0:32])    # c[:, 96:128] = x_out2[:, 0:32]
    bbd = jnp.concatenate(
        [b3[:, 32:64], b2[:, 32:64], b3[:, 0:32], b2[:, 0:32]], axis=1)  # [1,128]

    # Stage-2: hidden4; x_in4 = [x_out3[:,32:64] | x_out2[:,0:32]] = [c[:,0:32] | c[:,96:128]]
    w4p = jnp.zeros((128, 32), f32)
    w4p = w4p.at[0:32,   :].set(w4[0:32, :])
    w4p = w4p.at[96:128, :].set(w4[32:64, :])

    # Stage-3: hidden5 with permuted output columns (middle 64 lanes masked out).
    w5z = jnp.zeros((32, 128), f32)
    w5z = w5z.at[:, 0:32  ].set(w5[:, 32:64])
    w5z = w5z.at[:, 96:128].set(w5[:, 0:32])
    b5z = jnp.zeros((1, 128), f32)
    b5z = b5z.at[:, 0:32  ].set(b5[:, 32:64])
    b5z = b5z.at[:, 96:128].set(b5[:, 0:32])

    # Stage-4: block-diagonal hidden6 applied to [x_in6 | x_in7] = z[:, 0:128].
    # Each 784-wide output block is padded to 896 (7*128) columns so the
    # out7 block starts on a 128-lane boundary (lane-aligned static slice).
    w6bd = jnp.zeros((128, 1792), f32)
    w6bd = w6bd.at[0:64,    0:784   ].set(w6)   # x_in6 -> out6 cols
    w6bd = w6bd.at[64:128,  896:1680].set(w6)   # x_in7 -> out7 cols (hidden6 reused)
    b6bd = jnp.zeros((1, 1792), f32)
    b6bd = b6bd.at[:, 0:784   ].set(b6)
    b6bd = b6bd.at[:, 896:1680].set(b6)

    # Weights in bf16 (exact for the zero padding), biases stay f32
    # (added to the f32 MXU accumulator).
    return dict(wbd=wbd.astype(bf16), bbd=bbd,
                w4p=w4p.astype(bf16), b4=b4,
                w5z=w5z.astype(bf16), b5z=b5z,
                w6bd=w6bd.astype(bf16), b6bd=b6bd)


# -----------------------------------------------------------------------------
# Wrapper
# -----------------------------------------------------------------------------
def _auto_block_b():
    """Pick the batch tile from VMEM capacity: big tiles on 128-MiB v5e/v6e
    (amortize ~0.35 us per-grid-step overhead), 512 on 64-MiB v7x."""
    try:
        info = pltpu.get_tpu_info()
        vmem = int(getattr(info, "vmem_capacity_bytes", 64 << 20))
    except Exception:  # conservative fallback (v7x-sized)
        vmem = 64 << 20
    return 1024 if vmem >= (100 << 20) else 512


def net_forward(x, params, *, block_b=None, out_dtype=jnp.float32):
    """out_dtype=jnp.bfloat16 halves output HBM traffic (the kernel is
    memory-bound); default float32 preserves the PyTorch module's dtype."""
    B, F = x.shape
    assert F == 784, "expected flattened MNIST input [B, 784]"
    fp = fold_params(params)

    if block_b is None:
        block_b = _auto_block_b()

    # Sublane-aligned batch tile.
    bt = min(block_b, max(8, ((B + 7) // 8) * 8))
    bt = max(8, (bt // 8) * 8)
    # Guarantee >= 2 grid steps when the batch allows it, so
    # dimension_semantics=("parallel",) can shard the batch across the two
    # v7x TensorCores (a single-step grid leaves one core idle).
    if B >= 16:
        half = ((B + 1) // 2 + 7) // 8 * 8
        bt = min(bt, half)

    Bp = int(pl.cdiv(B, bt)) * bt
    if Bp != B:
        x = jnp.pad(x, ((0, Bp - B), (0, 0)))
    grid = (Bp // bt,)

    def const_spec(shape):
        return pl.BlockSpec(shape, lambda i: (0, 0))   # resident weights/biases

    batched_in = pl.BlockSpec((bt, 784), lambda i: (i, 0))
    batched_out = pl.BlockSpec((bt, 784), lambda i: (i, 0))

    # Advisory cost estimate: this kernel is HBM-bandwidth bound.
    out_bytes = jnp.dtype(out_dtype).itemsize
    weight_bytes = sum(int(v.size) * v.dtype.itemsize for v in fp.values())
    flops = 2 * Bp * (784 * 128 + 128 * 32 + 32 * 128 + 128 * 1792)
    bytes_accessed = Bp * 784 * 4 + 2 * Bp * 784 * out_bytes + weight_bytes
    cost = pl.CostEstimate(flops=flops, transcendentals=0,
                           bytes_accessed=bytes_accessed)

    cp_kwargs = dict(dimension_semantics=("parallel",))
    if bt > 512:
        # Only needed for the big-tile (v5e/v6e) path; ~29-31 MiB working set
        # at bt=1024 exceeds the 16/32 MiB scoped defaults.
        cp_kwargs["vmem_limit_bytes"] = 96 << 20

    out6, out7 = pl.pallas_call(
        net_kernel,
        out_shape=(jax.ShapeDtypeStruct((Bp, 784), out_dtype),
                   jax.ShapeDtypeStruct((Bp, 784), out_dtype)),
        grid=grid,
        in_specs=[batched_in,
                  const_spec((784, 128)),  const_spec((1, 128)),
                  const_spec((128, 32)),   const_spec((1, 32)),
                  const_spec((32, 128)),   const_spec((1, 128)),
                  const_spec((128, 1792)), const_spec((1, 1792))],
        out_specs=(batched_out, batched_out),
        compiler_params=pltpu.CompilerParams(**cp_kwargs),
        cost_estimate=cost,
    )(x, fp["wbd"], fp["bbd"], fp["w4p"], fp["b4"],
      fp["w5z"], fp["b5z"], fp["w6bd"], fp["b6bd"])

    if Bp != B:
        out6, out7 = out6[:B], out7[:B]
    return out6, out7


# -----------------------------------------------------------------------------
# Parameter init (PyTorch nn.Linear style) and pure-JAX reference
# -----------------------------------------------------------------------------
def init_params(key):
    """U(-1/sqrt(fan_in), 1/sqrt(fan_in)); weights stored [in, out]."""
    def linear(key, fan_in, fan_out):
        kw, kb = jax.random.split(key)
        bound = 1.0 / jnp.sqrt(float(fan_in))
        w = jax.random.uniform(kw, (fan_in, fan_out), jnp.float32, -bound, bound)
        b = jax.random.uniform(kb, (1, fan_out), jnp.float32, -bound, bound)
        return w, b

    keys = jax.random.split(key, 6)
    params = {}
    params["w2"], params["b2"] = linear(keys[0], 392, 64)
    params["w3"], params["b3"] = linear(keys[1], 392, 64)
    params["w4"], params["b4"] = linear(keys[2], 64, 32)
    params["w5"], params["b5"] = linear(keys[3], 32, 64)
    params["w6"], params["b6"] = linear(keys[4], 64, 784)
    # hidden7 exists in the module but is unused in forward (shape fidelity only).
    params["w7"], params["b7"] = linear(keys[5], 64, 784)
    return params


def net_forward_ref(x, p):
    relu = lambda v: jnp.maximum(v, 0.0)
    x_in3, x_in2 = x[:, :392], x[:, 392:]
    x_out3 = relu(x_in3 @ p["w3"] + p["b3"])
    x_out2 = relu(x_in2 @ p["w2"] + p["b2"])
    x_in7_1, x_in4_1 = x_out3[:, :32], x_out3[:, 32:]
    x_in6_2, x_in4_2 = x_out2[:, 32:], x_out2[:, :32]
    x_in4 = jnp.concatenate((x_in4_1, x_in4_2), axis=1)
    x_out4 = relu(x_in4 @ p["w4"] + p["b4"])
    x_out5 = relu(x_out4 @ p["w5"] + p["b5"])
    x_in7_2, x_in6_1 = x_out5[:, :32], x_out5[:, 32:]
    x_in6 = jnp.concatenate((x_in6_1, x_in6_2), axis=1)
    x_in7 = jnp.concatenate((x_in7_1, x_in7_2), axis=1)
    x_out6 = relu(x_in6 @ p["w6"] + p["b6"])
    x_out7 = relu(x_in7 @ p["w6"] + p["b6"])   # hidden6 reused, as in the PyTorch forward
    return x_out6, x_out7


if __name__ == "__main__":
    key = jax.random.PRNGKey(0)
    kx, kp = jax.random.split(key)

    B = 8
    x = jax.random.normal(kx, (B, 784), dtype=jnp.float32)
    params = init_params(kp)

    out6, out7 = net_forward(x, params)
    out6, out7 = jax.block_until_ready((out6, out7))

    ref6, ref7 = net_forward_ref(x, params)
    assert out6.shape == (B, 784) and out7.shape == (B, 784)
    # bf16 matmuls (f32 accumulation) vs the f32 reference: relaxed tolerance.
    assert jnp.allclose(out6, ref6, atol=5e-2, rtol=5e-2)
    assert jnp.allclose(out7, ref7, atol=5e-2, rtol=5e-2)

    print("KERNEL_OK")
</pallas_src>

<mosaic_0001>
module attributes {stable_mosaic.version = 11 : i64} {
  func.func @net_kernel(%arg0: i32, %arg1: memref<8x784xf32, #tpu.memory_space<vmem>>, %arg2: memref<784x128xbf16, #tpu.memory_space<vmem>>, %arg3: memref<1x128xf32, #tpu.memory_space<vmem>>, %arg4: memref<128x32xbf16, #tpu.memory_space<vmem>>, %arg5: memref<1x32xf32, #tpu.memory_space<vmem>>, %arg6: memref<32x128xbf16, #tpu.memory_space<vmem>>, %arg7: memref<1x128xf32, #tpu.memory_space<vmem>>, %arg8: memref<128x1792xbf16, #tpu.memory_space<vmem>>, %arg9: memref<1x1792xf32, #tpu.memory_space<vmem>>, %arg10: memref<8x784xf32, #tpu.memory_space<vmem>>, %arg11: memref<8x784xf32, #tpu.memory_space<vmem>>) attributes {dimension_semantics = [#tpu.dimension_semantics<parallel>], iteration_bounds = array<i64: 1>, scalar_prefetch = 0 : i64, scratch_operands = 0 : i64, tpu.core_type = #tpu.core_type<tc>, window_params = [{transform_indices = @transform_0, window_bounds = array<i64: 8, 784>}, {pipeline_mode = #tpu.pipeline_mode<synchronous>, transform_indices = @transform_1, window_bounds = array<i64: 784, 128>}, {pipeline_mode = #tpu.pipeline_mode<synchronous>, transform_indices = @transform_2, window_bounds = array<i64: 1, 128>}, {pipeline_mode = #tpu.pipeline_mode<synchronous>, transform_indices = @transform_3, window_bounds = array<i64: 128, 32>}, {pipeline_mode = #tpu.pipeline_mode<synchronous>, transform_indices = @transform_4, window_bounds = array<i64: 1, 32>}, {pipeline_mode = #tpu.pipeline_mode<synchronous>, transform_indices = @transform_5, window_bounds = array<i64: 32, 128>}, {pipeline_mode = #tpu.pipeline_mode<synchronous>, transform_indices = @transform_6, window_bounds = array<i64: 1, 128>}, {pipeline_mode = #tpu.pipeline_mode<synchronous>, transform_indices = @transform_7, window_bounds = array<i64: 128, 1792>}, {pipeline_mode = #tpu.pipeline_mode<synchronous>, transform_indices = @transform_8, window_bounds = array<i64: 1, 1792>}, {transform_indices = @transform_9, window_bounds = array<i64: 8, 784>}, {transform_indices = @transform_10, window_bounds = array<i64: 8, 784>}]} {
    %c0 = arith.constant 0 : index
    %c0_0 = arith.constant 0 : index
    %0 = vector.load %arg1[%c0, %c0_0] : memref<8x784xf32, #tpu.memory_space<vmem>>, vector<8x784xf32>
    %1 = arith.truncf %0 : vector<8x784xf32> to vector<8x784xbf16>
    %c0_1 = arith.constant 0 : index
    %c0_2 = arith.constant 0 : index
    %2 = vector.load %arg2[%c0_1, %c0_2] : memref<784x128xbf16, #tpu.memory_space<vmem>>, vector<784x128xbf16>
    %cst = arith.constant dense<0.000000e+00> : vector<8x128xf32>
    %3 = tpu.matmul %1, %2, %cst {dimension_numbers = #tpu.dot_dimension_numbers<[1], [0], [0], [1], [0, 0, 1, 1], [], []>} : vector<8x784xbf16>, vector<784x128xbf16>, vector<8x128xf32> -> vector<8x128xf32>
    %c0_3 = arith.constant 0 : index
    %c0_4 = arith.constant 0 : index
    %4 = vector.load %arg3[%c0_3, %c0_4] : memref<1x128xf32, #tpu.memory_space<vmem>>, vector<1x128xf32>
    %5 = vector.broadcast %4 : vector<1x128xf32> to vector<8x128xf32>
    %6 = arith.addf %3, %5 : vector<8x128xf32>
    %cst_5 = arith.constant 0.000000e+00 : f32
    %7 = vector.broadcast %cst_5 : f32 to vector<8x128xf32>
    %8 = arith.maximumf %6, %7 : vector<8x128xf32>
    %9 = arith.truncf %8 : vector<8x128xf32> to vector<8x128xbf16>
    %c0_6 = arith.constant 0 : index
    %c0_7 = arith.constant 0 : index
    %10 = vector.load %arg4[%c0_6, %c0_7] : memref<128x32xbf16, #tpu.memory_space<vmem>>, vector<128x32xbf16>
    %cst_8 = arith.constant dense<0.000000e+00> : vector<8x32xf32>
    %11 = tpu.matmul %9, %10, %cst_8 {dimension_numbers = #tpu.dot_dimension_numbers<[1], [0], [0], [1], [0, 0, 1, 1], [], []>} : vector<8x128xbf16>, vector<128x32xbf16>, vector<8x32xf32> -> vector<8x32xf32>
    %c0_9 = arith.constant 0 : index
    %c0_10 = arith.constant 0 : index
    %12 = vector.load %arg5[%c0_9, %c0_10] : memref<1x32xf32, #tpu.memory_space<vmem>>, vector<1x32xf32>
    %13 = vector.broadcast %12 : vector<1x32xf32> to vector<8x32xf32>
    %14 = arith.addf %11, %13 : vector<8x32xf32>
    %cst_11 = arith.constant 0.000000e+00 : f32
    %15 = vector.broadcast %cst_11 : f32 to vector<8x32xf32>
    %16 = arith.maximumf %14, %15 : vector<8x32xf32>
    %17 = arith.truncf %16 : vector<8x32xf32> to vector<8x32xbf16>
    %c0_12 = arith.constant 0 : index
    %c0_13 = arith.constant 0 : index
    %18 = vector.load %arg6[%c0_12, %c0_13] : memref<32x128xbf16, #tpu.memory_space<vmem>>, vector<32x128xbf16>
    %cst_14 = arith.constant dense<0.000000e+00> : vector<8x128xf32>
    %19 = tpu.matmul %17, %18, %cst_14 {dimension_numbers = #tpu.dot_dimension_numbers<[1], [0], [0], [1], [0, 0, 1, 1], [], []>} : vector<8x32xbf16>, vector<32x128xbf16>, vector<8x128xf32> -> vector<8x128xf32>
    %c0_15 = arith.constant 0 : index
    %c0_16 = arith.constant 0 : index
    %20 = vector.load %arg7[%c0_15, %c0_16] : memref<1x128xf32, #tpu.memory_space<vmem>>, vector<1x128xf32>
    %21 = vector.broadcast %20 : vector<1x128xf32> to vector<8x128xf32>
    %22 = arith.addf %19, %21 : vector<8x128xf32>
    %cst_17 = arith.constant 0.000000e+00 : f32
    %23 = vector.broadcast %cst_17 : f32 to vector<8x128xf32>
    %24 = arith.maximumf %22, %23 : vector<8x128xf32>
    %25 = tpu.iota {dimensions = array<i32: 1>} : vector<1x128xi32>
    %c32_i32 = arith.constant 32 : i32
    %26 = vector.broadcast %c32_i32 : i32 to vector<1x128xi32>
    %27 = arith.cmpi sge, %25, %26 : vector<1x128xi32>
    %c96_i32 = arith.constant 96 : i32
    %28 = vector.broadcast %c96_i32 : i32 to vector<1x128xi32>
    %29 = arith.cmpi slt, %25, %28 : vector<1x128xi32>
    %30 = arith.andi %27, %29 : vector<1x128xi1>
    %31 = vector.shape_cast %30 : vector<1x128xi1> to vector<1x128xi1>
    %32 = vector.broadcast %31 : vector<1x128xi1> to vector<8x128xi1>
    %33 = arith.select %32, %8, %24 : vector<8x128xi1>, vector<8x128xf32>
    %34 = arith.truncf %33 : vector<8x128xf32> to vector<8x128xbf16>
    %c0_18 = arith.constant 0 : index
    %c0_19 = arith.constant 0 : index
    %35 = vector.load %arg8[%c0_18, %c0_19] : memref<128x1792xbf16, #tpu.memory_space<vmem>>, vector<128x1792xbf16>
    %cst_20 = arith.constant dense<0.000000e+00> : vector<8x1792xf32>
    %36 = tpu.matmul %34, %35, %cst_20 {dimension_numbers = #tpu.dot_dimension_numbers<[1], [0], [0], [1], [0, 0, 1, 1], [], []>} : vector<8x128xbf16>, vector<128x1792xbf16>, vector<8x1792xf32> -> vector<8x1792xf32>
    %c0_21 = arith.constant 0 : index
    %c0_22 = arith.constant 0 : index
    %37 = vector.load %arg9[%c0_21, %c0_22] : memref<1x1792xf32, #tpu.memory_space<vmem>>, vector<1x1792xf32>
    %38 = vector.broadcast %37 : vector<1x1792xf32> to vector<8x1792xf32>
    %39 = arith.addf %36, %38 : vector<8x1792xf32>
    %cst_23 = arith.constant 0.000000e+00 : f32
    %40 = vector.broadcast %cst_23 : f32 to vector<8x1792xf32>
    %41 = arith.maximumf %39, %40 : vector<8x1792xf32>
    %42 = vector.extract_strided_slice %41 {offsets = [0, 0], sizes = [8, 784], strides = [1, 1]} : vector<8x1792xf32> to vector<8x784xf32>
    %c0_24 = arith.constant 0 : index
    %c0_25 = arith.constant 0 : index
    %43 = vector.load %arg10[%c0_24, %c0_25] : memref<8x784xf32, #tpu.memory_space<vmem>>, vector<8x784xf32>
    tpu.vector_store %arg10[%c0_24, %c0_25], %42 {strides = array<i32>} : memref<8x784xf32, #tpu.memory_space<vmem>>, vector<8x784xf32>,
    %44 = vector.extract_strided_slice %41 {offsets = [0, 896], sizes = [8, 784], strides = [1, 1]} : vector<8x1792xf32> to vector<8x784xf32>
    %c0_26 = arith.constant 0 : index
    %c0_27 = arith.constant 0 : index
    %45 = vector.load %arg11[%c0_26, %c0_27] : memref<8x784xf32, #tpu.memory_space<vmem>>, vector<8x784xf32>
    tpu.vector_store %arg11[%c0_26, %c0_27], %44 {strides = array<i32>} : memref<8x784xf32, #tpu.memory_space<vmem>>, vector<8x784xf32>,
    return
  }
  func.func @transform_0(%arg0: i32) -> (i32, i32) {
    %c0_i32 = arith.constant 0 : i32
    %c0_i32_0 = arith.constant 0 : i32
    return %arg0, %c0_i32 : i32, i32
  }
  func.func @transform_1(%arg0: i32) -> (i32, i32) {
    %c0_i32 = arith.constant 0 : i32
    %c0_i32_0 = arith.constant 0 : i32
    %c0_i32_1 = arith.constant 0 : i32
    return %c0_i32, %c0_i32_0 : i32, i32
  }
  func.func @transform_2(%arg0: i32) -> (i32, i32) {
    %c0_i32 = arith.constant 0 : i32
    %c0_i32_0 = arith.constant 0 : i32
    %c0_i32_1 = arith.constant 0 : i32
    return %c0_i32, %c0_i32_0 : i32, i32
  }
  func.func @transform_3(%arg0: i32) -> (i32, i32) {
    %c0_i32 = arith.constant 0 : i32
    %c0_i32_0 = arith.constant 0 : i32
    %c0_i32_1 = arith.constant 0 : i32
    return %c0_i32, %c0_i32_0 : i32, i32
  }
  func.func @transform_4(%arg0: i32) -> (i32, i32) {
    %c0_i32 = arith.constant 0 : i32
    %c0_i32_0 = arith.constant 0 : i32
    %c0_i32_1 = arith.constant 0 : i32
    return %c0_i32, %c0_i32_0 : i32, i32
  }
  func.func @transform_5(%arg0: i32) -> (i32, i32) {
    %c0_i32 = arith.constant 0 : i32
    %c0_i32_0 = arith.constant 0 : i32
    %c0_i32_1 = arith.constant 0 : i32
    return %c0_i32, %c0_i32_0 : i32, i32
  }
  func.func @transform_6(%arg0: i32) -> (i32, i32) {
    %c0_i32 = arith.constant 0 : i32
    %c0_i32_0 = arith.constant 0 : i32
    %c0_i32_1 = arith.constant 0 : i32
    return %c0_i32, %c0_i32_0 : i32, i32
  }
  func.func @transform_7(%arg0: i32) -> (i32, i32) {
    %c0_i32 = arith.constant 0 : i32
    %c0_i32_0 = arith.constant 0 : i32
    %c0_i32_1 = arith.constant 0 : i32
    return %c0_i32, %c0_i32_0 : i32, i32
  }
  func.func @transform_8(%arg0: i32) -> (i32, i32) {
    %c0_i32 = arith.constant 0 : i32
    %c0_i32_0 = arith.constant 0 : i32
    %c0_i32_1 = arith.constant 0 : i32
    return %c0_i32, %c0_i32_0 : i32, i32
  }
  func.func @transform_9(%arg0: i32) -> (i32, i32) {
    %c0_i32 = arith.constant 0 : i32
    %c0_i32_0 = arith.constant 0 : i32
    return %arg0, %c0_i32 : i32, i32
  }
  func.func @transform_10(%arg0: i32) -> (i32, i32) {
    %c0_i32 = arith.constant 0 : i32
    %c0_i32_0 = arith.constant 0 : i32
    return %arg0, %c0_i32 : i32, i32
  }
}

</mosaic_0001>

<llo_original>
// kernel: tpu_custom_call.1
$region0: #{tpu_custom_call.1}
  #allocation0 [shape = 'u32[]', space=smem, size = 0x4, offset = 0x4, fixed_abs, tag = 'smem constant byte address 0x4 - core index']
  #allocation1 [shape = 'u32[144,128]{1,0:T(1,128)}', space=vmem, size = 0x12000, scoped, tag = 'internal scratch']
  %s0 = inlined_call_operand.vmem [shape: f32[8,784], index: 0, kind: input, shape index: {}]
  %s1 = inlined_call_operand.hbm [shape: bf16[784,128], index: 1, kind: input, shape index: {}]
  %s2 = inlined_call_operand.vmem [shape: f32[1,128], index: 2, kind: input, shape index: {}]
  %s3 = inlined_call_operand.vmem [shape: bf16[128,32], index: 3, kind: input, shape index: {}]
  %s4 = inlined_call_operand.vmem [shape: f32[1,32], index: 4, kind: input, shape index: {}]
  %s5 = inlined_call_operand.vmem [shape: bf16[32,128], index: 5, kind: input, shape index: {}]
  %s6 = inlined_call_operand.vmem [shape: f32[1,128], index: 6, kind: input, shape index: {}]
  %s7 = inlined_call_operand.hbm [shape: bf16[128,1792], index: 7, kind: input, shape index: {}]
  %s8 = inlined_call_operand.vmem [shape: f32[1,1792], index: 8, kind: input, shape index: {}]
  %s9 = inlined_call_operand.hbm [shape: f32[8,784], index: 9, kind: output, shape index: {0}]
  %s10 = inlined_call_operand.hbm [shape: f32[8,784], index: 10, kind: output, shape index: {1}]
  %11 = xla_tuple %s9, %s10
  %s12 = sld [smem:[#allocation0]]
  $region62: #{tpu_custom_call.1} parent=0
    _
  %s14 = ssub.s32 1, %s12
  %s15 = scalar_select 0, %s14, %s12
  $region1: #{tpu_custom_call.1} parent=0
    #allocation2 [shape = 'u8[200704]{0}', space=vmem, size = 0x31000, scoped, tag = 'input window, operand 1, single buffered']
    #allocation3 [shape = 's32[1]{0}', space=sflag, size = 0x4, scoped, tag = 'scoped memory for tpu_custom_call.1']
    #allocation4 [shape = 's32[1]{0}', space=sflag, size = 0x4, scoped, tag = 'scoped memory for tpu_custom_call.1']
    #allocation5 [shape = 'u8[458752]{0}', space=vmem, size = 0x70000, scoped, tag = 'input window, operand 7, single buffered']
    #allocation6 [shape = 's32[1]{0}', space=sflag, size = 0x4, scoped, tag = 'scoped memory for tpu_custom_call.1']
    #allocation7 [shape = 'u8[28672]{0}', space=vmem, size = 0x7000, scoped, tag = 'output window, operand 0, single buffered']
    #allocation8 [shape = 'u8[28672]{0}', space=vmem, size = 0x7000, scoped, tag = 'output window, operand 1, single buffered']
    #allocation9 [shape = 's32[1]{0}', space=sflag, size = 0x4, scoped, tag = 'scoped memory for tpu_custom_call.1']
    %16 = vsyncpa [#allocation3], 0
    %17 = vsyncpa [#allocation6], 0
    %18 = vsyncpa [#allocation4], 0
    %19 = vsyncpa [#allocation9], 0
    // Predicated region
    $region2: #{tpu_custom_call.1} parent=1 // pred_check
      _
    $region3: #{tpu_custom_call.1} parent=1 // pred_check_branch
      %21 = sbr.rel (0) target = $region5
    $region4: #{tpu_custom_call.1} parent=1 // pred_region
      _
    $region5: #{tpu_custom_call.1} parent=1 // pred_fallthru
      _
    // Predicated region
    $region6: #{tpu_custom_call.1} parent=1 // pred_check
      _
    $region7: #{tpu_custom_call.1} parent=1 // pred_check_branch
      %23 = sbr.rel (0) target = $region9
    $region8: #{tpu_custom_call.1} parent=1 // pred_region
      %s25 = ssub.s32 6272, 6272
      %26 = vsyncadd [#allocation3], %s25
      %s27 = sshll.u32 [#allocation2], 4
      %s28 = int_to_ptr.vmem [resolvable:$true] %s27
      %33 = dma.hbm_to_vmem [thread:$0]  %s1, 6272, %s28, [#allocation3], 64, 64, 4
    $region9: #{tpu_custom_call.1} parent=1 // pred_fallthru
      _
    // Predicated region
    $region10: #{tpu_custom_call.1} parent=1 // pred_check
      _
    $region11: #{tpu_custom_call.1} parent=1 // pred_check_branch
      %35 = sbr.rel (0) target = $region13
    $region12: #{tpu_custom_call.1} parent=1 // pred_region
      _
    $region13: #{tpu_custom_call.1} parent=1 // pred_fallthru
      _
    // Predicated region
    $region14: #{tpu_custom_call.1} parent=1 // pred_check
      _
    $region15: #{tpu_custom_call.1} parent=1 // pred_check_branch
      %37 = sbr.rel (0) target = $region17
    $region16: #{tpu_custom_call.1} parent=1 // pred_region
      _
    $region17: #{tpu_custom_call.1} parent=1 // pred_fallthru
      _
    // Predicated region
    $region18: #{tpu_custom_call.1} parent=1 // pred_check
      _
    $region19: #{tpu_custom_call.1} parent=1 // pred_check_branch
      %39 = sbr.rel (0) target = $region21
    $region20: #{tpu_custom_call.1} parent=1 // pred_region
      _
    $region21: #{tpu_custom_call.1} parent=1 // pred_fallthru
      _
    // Predicated region
    $region22: #{tpu_custom_call.1} parent=1 // pred_check
      _
    $region23: #{tpu_custom_call.1} parent=1 // pred_check_branch
      %41 = sbr.rel (0) target = $region25
    $region24: #{tpu_custom_call.1} parent=1 // pred_region
      _
    $region25: #{tpu_custom_call.1} parent=1 // pred_fallthru
      _
    // Predicated region
    $region26: #{tpu_custom_call.1} parent=1 // pred_check
      _
    $region27: #{tpu_custom_call.1} parent=1 // pred_check_branch
      %43 = sbr.rel (0) target = $region29
    $region28: #{tpu_custom_call.1} parent=1 // pred_region
      _
    $region29: #{tpu_custom_call.1} parent=1 // pred_fallthru
      _
    // Predicated region
    $region30: #{tpu_custom_call.1} parent=1 // pred_check
      _
    $region31: #{tpu_custom_call.1} parent=1 // pred_check_branch
      %45 = sbr.rel (0) target = $region33
    $region32: #{tpu_custom_call.1} parent=1 // pred_region
      %s47 = ssub.s32 14336, 14336
      %48 = vsyncadd [#allocation6], %s47
      %s49 = sshll.u32 [#allocation5], 4
      %s50 = int_to_ptr.vmem [resolvable:$true] %s49
      %55 = dma.hbm_to_vmem [thread:$0]  %s7, 14336, %s50, [#allocation6], 896, 896, 56
    $region33: #{tpu_custom_call.1} parent=1 // pred_fallthru
      _
    // Predicated region
    $region34: #{tpu_custom_call.1} parent=1 // pred_check
      _
    $region35: #{tpu_custom_call.1} parent=1 // pred_check_branch
      %57 = sbr.rel (0) target = $region37
    $region36: #{tpu_custom_call.1} parent=1 // pred_region
      _
    $region37: #{tpu_custom_call.1} parent=1 // pred_fallthru
      _
    // Predicated region
    $region38: #{tpu_custom_call.1} parent=1 // pred_check
      _
    $region39: #{tpu_custom_call.1} parent=1 // pred_check_branch
      %59 = sbr.rel (0) target = $region41
    $region40: #{tpu_custom_call.1} parent=1 // pred_region
      %60 = dma.done [#allocation3], 6272
    $region41: #{tpu_custom_call.1} parent=1 // pred_fallthru
      _
    // Predicated region
    $region42: #{tpu_custom_call.1} parent=1 // pred_check
      _
    $region43: #{tpu_custom_call.1} parent=1 // pred_check_branch
      %62 = sbr.rel (0) target = $region45
    $region44: #{tpu_custom_call.1} parent=1 // pred_region
      %63 = dma.done [#allocation6], 14336
    $region45: #{tpu_custom_call.1} parent=1 // pred_fallthru
      _
    %v65 = vld [vmem:[%s0] sm:$0xff]
    %v66 = vld [vmem:[%s0 + $0x8] sm:$0xff]
    %v67 = vld [vmem:[%s0 + $0x10] sm:$0xff]
    %v68 = vld [vmem:[%s0 + $0x18] sm:$0xff]
    %v69 = vld [vmem:[%s0 + $0x20] sm:$0xff]
    %v70 = vld [vmem:[%s0 + $0x28] sm:$0xff]
    %v71 = vld [vmem:[%s0 + $0x30] sm:$0xff]
    %v72 = vpack.c.bf16 %v65, %v65
    %v73 = vpack.c.bf16 %v66, %v66
    %v74 = vpack.c.bf16 %v67, %v67
    %v75 = vpack.c.bf16 %v68, %v68
    %v76 = vpack.c.bf16 %v69, %v69
    %v77 = vpack.c.bf16 %v70, %v70
    %v78 = vpack.c.bf16 %v71, %v71
    %v79 = vld [vmem:[#allocation2] sm:$0xf]
    %v80 = vld [vmem:[#allocation2 + $0x4] sm:$0xf]
    %v81 = vld [vmem:[#allocation2 + $0x8] sm:$0xf]
    %v82 = vld [vmem:[#allocation2 + $0xc] sm:$0xf]
    %v83 = vld [vmem:[#allocation2 + $0x10] sm:$0xf]
    %v84 = vld [vmem:[#allocation2 + $0x14] sm:$0xf]
    %v85 = vld [vmem:[#allocation2 + $0x18] sm:$0xf]
    %v86 = vld [vmem:[#allocation2 + $0x1c] sm:$0xf]
    %v87 = vld [vmem:[#allocation2 + $0x20] sm:$0xf]
    %v88 = vld [vmem:[#allocation2 + $0x24] sm:$0xf]
    %v89 = vld [vmem:[#allocation2 + $0x28] sm:$0xf]
    %v90 = vld [vmem:[#allocation2 + $0x2c] sm:$0xf]
    %v91 = vld [vmem:[#allocation2 + $0x30] sm:$0xf]
    %v92 = vld [vmem:[#allocation2 + $0x34] sm:$0xf]
    %v93 = vld [vmem:[#allocation2 + $0x38] sm:$0xf]
    %v94 = vld [vmem:[#allocation2 + $0x3c] sm:$0xf]
    %v95 = vld [vmem:[#allocation2 + $0x40] sm:$0xf]
    %v96 = vld [vmem:[#allocation2 + $0x44] sm:$0xf]
    %v97 = vld [vmem:[#allocation2 + $0x48] sm:$0xf]
    %v98 = vld [vmem:[#allocation2 + $0x4c] sm:$0xf]
    %v99 = vld [vmem:[#allocation2 + $0x50] sm:$0xf]
    %v100 = vld [vmem:[#allocation2 + $0x54] sm:$0xf]
    %v101 = vld [vmem:[#allocation2 + $0x58] sm:$0xf]
    %v102 = vld [vmem:[#allocation2 + $0x5c] sm:$0xf]
    %v103 = vld [vmem:[#allocation2 + $0x60] sm:$0xf]
    %v104 = vld [vmem:[#allocation2 + $0x64] sm:$0xf]
    %v105 = vld [vmem:[#allocation2 + $0x68] sm:$0xf]
    %v106 = vld [vmem:[#allocation2 + $0x6c] sm:$0xf]
    %v107 = vld [vmem:[#allocation2 + $0x70] sm:$0xf]
    %v108 = vld [vmem:[#allocation2 + $0x74] sm:$0xf]
    %v109 = vld [vmem:[#allocation2 + $0x78] sm:$0xf]
    %v110 = vld [vmem:[#allocation2 + $0x7c] sm:$0xf]
    %v111 = vld [vmem:[#allocation2 + $0x80] sm:$0xf]
    %v112 = vld [vmem:[#allocation2 + $0x84] sm:$0xf]
    %v113 = vld [vmem:[#allocation2 + $0x88] sm:$0xf]
    %v114 = vld [vmem:[#allocation2 + $0x8c] sm:$0xf]
    %v115 = vld [vmem:[#allocation2 + $0x90] sm:$0xf]
    %v116 = vld [vmem:[#allocation2 + $0x94] sm:$0xf]
    %v117 = vld [vmem:[#allocation2 + $0x98] sm:$0xf]
    %v118 = vld [vmem:[#allocation2 + $0x9c] sm:$0xf]
    %v119 = vld [vmem:[#allocation2 + $0xa0] sm:$0xf]
    %v120 = vld [vmem:[#allocation2 + $0xa4] sm:$0xf]
    %v121 = vld [vmem:[#allocation2 + $0xa8] sm:$0xf]
    %v122 = vld [vmem:[#allocation2 + $0xac] sm:$0xf]
    %v123 = vld [vmem:[#allocation2 + $0xb0] sm:$0xf]
    %v124 = vld [vmem:[#allocation2 + $0xb4] sm:$0xf]
    %v125 = vld [vmem:[#allocation2 + $0xb8] sm:$0xf]
    %v126 = vld [vmem:[#allocation2 + $0xbc] sm:$0xf]
    %v127 = vld [vmem:[#allocation2 + $0xc0] sm:$0xf]
    %v128 = vld [vmem:[#allocation2 + $0xc4] sm:$0xf]
    %v129 = vld [vmem:[#allocation2 + $0xc8] sm:$0xf]
    %v130 = vld [vmem:[#allocation2 + $0xcc] sm:$0xf]
    %v131 = vld [vmem:[#allocation2 + $0xd0] sm:$0xf]
    %v132 = vld [vmem:[#allocation2 + $0xd4] sm:$0xf]
    %v133 = vld [vmem:[#allocation2 + $0xd8] sm:$0xf]
    %v134 = vld [vmem:[#allocation2 + $0xdc] sm:$0xf]
    %v135 = vld [vmem:[#allocation2 + $0xe0] sm:$0xf]
    %v136 = vld [vmem:[#allocation2 + $0xe4] sm:$0xf]
    %v137 = vld [vmem:[#allocation2 + $0xe8] sm:$0xf]
    %v138 = vld [vmem:[#allocation2 + $0xec] sm:$0xf]
    %v139 = vld [vmem:[#allocation2 + $0xf0] sm:$0xf]
    %v140 = vld [vmem:[#allocation2 + $0xf4] sm:$0xf]
    %v141 = vld [vmem:[#allocation2 + $0xf8] sm:$0xf]
    %v142 = vld [vmem:[#allocation2 + $0xfc] sm:$0xf]
    %v143 = vld [vmem:[#allocation2 + $0x100] sm:$0xf]
    %v144 = vld [vmem:[#allocation2 + $0x104] sm:$0xf]
    %v145 = vld [vmem:[#allocation2 + $0x108] sm:$0xf]
    %v146 = vld [vmem:[#allocation2 + $0x10c] sm:$0xf]
    %v147 = vld [vmem:[#allocation2 + $0x110] sm:$0xf]
    %v148 = vld [vmem:[#allocation2 + $0x114] sm:$0xf]
    %v149 = vld [vmem:[#allocation2 + $0x118] sm:$0xf]
    %v150 = vld [vmem:[#allocation2 + $0x11c] sm:$0xf]
    %v151 = vld [vmem:[#allocation2 + $0x120] sm:$0xf]
    %v152 = vld [vmem:[#allocation2 + $0x124] sm:$0xf]
    %v153 = vld [vmem:[#allocation2 + $0x128] sm:$0xf]
    %v154 = vld [vmem:[#allocation2 + $0x12c] sm:$0xf]
    %v155 = vld [vmem:[#allocation2 + $0x130] sm:$0xf]
    %v156 = vld [vmem:[#allocation2 + $0x134] sm:$0xf]
    %v157 = vld [vmem:[#allocation2 + $0x138] sm:$0xf]
    %v158 = vld [vmem:[#allocation2 + $0x13c] sm:$0xf]
    %v159 = vld [vmem:[#allocation2 + $0x140] sm:$0xf]
    %v160 = vld [vmem:[#allocation2 + $0x144] sm:$0xf]
    %v161 = vld [vmem:[#allocation2 + $0x148] sm:$0xf]
    %v162 = vld [vmem:[#allocation2 + $0x14c] sm:$0xf]
    %v163 = vld [vmem:[#allocation2 + $0x150] sm:$0xf]
    %v164 = vld [vmem:[#allocation2 + $0x154] sm:$0xf]
    %v165 = vld [vmem:[#allocation2 + $0x158] sm:$0xf]
    %v166 = vld [vmem:[#allocation2 + $0x15c] sm:$0xf]
    %v167 = vld [vmem:[#allocation2 + $0x160] sm:$0xf]
    %v168 = vld [vmem:[#allocation2 + $0x164] sm:$0xf]
    %v169 = vld [vmem:[#allocation2 + $0x168] sm:$0xf]
    %v170 = vld [vmem:[#allocation2 + $0x16c] sm:$0xf]
    %v171 = vld [vmem:[#allocation2 + $0x170] sm:$0xf]
    %v172 = vld [vmem:[#allocation2 + $0x174] sm:$0xf]
    %v173 = vld [vmem:[#allocation2 + $0x178] sm:$0xf]
    %v174 = vld [vmem:[#allocation2 + $0x17c] sm:$0xf]
    %v175 = vld [vmem:[#allocation2 + $0x180] sm:$0xf]
    %v176 = vld [vmem:[#allocation2 + $0x184] sm:$0xf]
    %v177 = vld [vmem:[%s2] sm:$0x1]
    %v179 = vlaneseq
    %v180 = vshrl.u32 %v179, 7
    %v181 = vsub.s32 0, %v180
    %v182 = vrot.slane %v177, %v181
    %v282 = vunpack.c.l.b16 %v79
    %v283 = vunpack.c.l.b16 %v80
    %v284 = vunpack.c.l.b16 %v81
    %v285 = vunpack.c.l.b16 %v82
    %v286 = vunpack.c.l.b16 %v83
    %v287 = vunpack.c.l.b16 %v84
    %v288 = vunpack.c.l.b16 %v85
    %v289 = vunpack.c.l.b16 %v86
    %v290 = vunpack.c.l.b16 %v87
    %v291 = vunpack.c.l.b16 %v88
    %v292 = vunpack.c.l.b16 %v89
    %v293 = vunpack.c.l.b16 %v90
    %v294 = vunpack.c.l.b16 %v91
    %v295 = vunpack.c.l.b16 %v92
    %v296 = vunpack.c.l.b16 %v93
    %v297 = vunpack.c.l.b16 %v94
    %v298 = vunpack.c.l.b16 %v95
    %v299 = vunpack.c.l.b16 %v96
    %v300 = vunpack.c.l.b16 %v97
    %v301 = vunpack.c.l.b16 %v98
    %v302 = vunpack.c.l.b16 %v99
    %v303 = vunpack.c.l.b16 %v100
    %v304 = vunpack.c.l.b16 %v101
    %v305 = vunpack.c.l.b16 %v102
    %v306 = vunpack.c.l.b16 %v103
    %v307 = vunpack.c.l.b16 %v104
    %v308 = vunpack.c.l.b16 %v105
    %v309 = vunpack.c.l.b16 %v106
    %v310 = vunpack.c.l.b16 %v107
    %v311 = vunpack.c.l.b16 %v108
    %v312 = vunpack.c.l.b16 %v109
    %v313 = vunpack.c.l.b16 %v110
    %v314 = vunpack.c.l.b16 %v111
    %v315 = vunpack.c.l.b16 %v112
    %v316 = vunpack.c.l.b16 %v113
    %v317 = vunpack.c.l.b16 %v114
    %v318 = vunpack.c.l.b16 %v115
    %v319 = vunpack.c.l.b16 %v116
    %v320 = vunpack.c.l.b16 %v117
    %v321 = vunpack.c.l.b16 %v118
    %v322 = vunpack.c.l.b16 %v119
    %v323 = vunpack.c.l.b16 %v120
    %v324 = vunpack.c.l.b16 %v121
    %v325 = vunpack.c.l.b16 %v122
    %v326 = vunpack.c.l.b16 %v123
    %v327 = vunpack.c.l.b16 %v124
    %v328 = vunpack.c.l.b16 %v125
    %v329 = vunpack.c.l.b16 %v126
    %v330 = vunpack.c.l.b16 %v127
    %v331 = vunpack.c.l.b16 %v128
    %v332 = vunpack.c.l.b16 %v129
    %v333 = vunpack.c.l.b16 %v130
    %v334 = vunpack.c.l.b16 %v131
    %v335 = vunpack.c.l.b16 %v132
    %v336 = vunpack.c.l.b16 %v133
    %v337 = vunpack.c.l.b16 %v134
    %v338 = vunpack.c.l.b16 %v135
    %v339 = vunpack.c.l.b16 %v136
    %v340 = vunpack.c.l.b16 %v137
    %v341 = vunpack.c.l.b16 %v138
    %v342 = vunpack.c.l.b16 %v139
    %v343 = vunpack.c.l.b16 %v140
    %v344 = vunpack.c.l.b16 %v141
    %v345 = vunpack.c.l.b16 %v142
    %v346 = vunpack.c.l.b16 %v143
    %v347 = vunpack.c.l.b16 %v144
    %v348 = vunpack.c.l.b16 %v145
    %v349 = vunpack.c.l.b16 %v146
    %v350 = vunpack.c.l.b16 %v147
    %v351 = vunpack.c.l.b16 %v148
    %v352 = vunpack.c.l.b16 %v149
    %v353 = vunpack.c.l.b16 %v150
    %v354 = vunpack.c.l.b16 %v151
    %v355 = vunpack.c.l.b16 %v152
    %v356 = vunpack.c.l.b16 %v153
    %v357 = vunpack.c.l.b16 %v154
    %v358 = vunpack.c.l.b16 %v155
    %v359 = vunpack.c.l.b16 %v156
    %v360 = vunpack.c.l.b16 %v157
    %v361 = vunpack.c.l.b16 %v158
    %v362 = vunpack.c.l.b16 %v159
    %v363 = vunpack.c.l.b16 %v160
    %v364 = vunpack.c.l.b16 %v161
    %v365 = vunpack.c.l.b16 %v162
    %v366 = vunpack.c.l.b16 %v163
    %v367 = vunpack.c.l.b16 %v164
    %v368 = vunpack.c.l.b16 %v165
    %v369 = vunpack.c.l.b16 %v166
    %v370 = vunpack.c.l.b16 %v167
    %v371 = vunpack.c.l.b16 %v168
    %v372 = vunpack.c.l.b16 %v169
    %v373 = vunpack.c.l.b16 %v170
    %v374 = vunpack.c.l.b16 %v171
    %v375 = vunpack.c.l.b16 %v172
    %v376 = vunpack.c.l.b16 %v173
    %v377 = vunpack.c.l.b16 %v174
    %v378 = vunpack.c.l.b16 %v175
    %v379 = vunpack.c.l.b16 %v176
    %v380 = vpack.c.b16 %v283, %v282
    %v381 = vpack.c.b16 %v285, %v284
    %v382 = vpack.c.b16 %v287, %v286
    %v383 = vpack.c.b16 %v289, %v288
    %v384 = vpack.c.b16 %v291, %v290
    %v385 = vpack.c.b16 %v293, %v292
    %v386 = vpack.c.b16 %v295, %v294
    %v387 = vpack.c.b16 %v297, %v296
    %v388 = vpack.c.b16 %v299, %v298
    %v389 = vpack.c.b16 %v301, %v300
    %v390 = vpack.c.b16 %v303, %v302
    %v391 = vpack.c.b16 %v305, %v304
    %v392 = vpack.c.b16 %v307, %v306
    %v393 = vpack.c.b16 %v309, %v308
    %v394 = vpack.c.b16 %v311, %v310
    %v395 = vpack.c.b16 %v313, %v312
    %v396 = vpack.c.b16 %v315, %v314
    %v397 = vpack.c.b16 %v317, %v316
    %v398 = vpack.c.b16 %v319, %v318
    %v399 = vpack.c.b16 %v321, %v320
    %v400 = vpack.c.b16 %v323, %v322
    %v401 = vpack.c.b16 %v325, %v324
    %v402 = vpack.c.b16 %v327, %v326
    %v403 = vpack.c.b16 %v329, %v328
    %v404 = vpack.c.b16 %v331, %v330
    %v405 = vpack.c.b16 %v333, %v332
    %v406 = vpack.c.b16 %v335, %v334
    %v407 = vpack.c.b16 %v337, %v336
    %v408 = vpack.c.b16 %v339, %v338
    %v409 = vpack.c.b16 %v341, %v340
    %v410 = vpack.c.b16 %v343, %v342
    %v411 = vpack.c.b16 %v345, %v344
    %v412 = vpack.c.b16 %v347, %v346
    %v413 = vpack.c.b16 %v349, %v348
    %v414 = vpack.c.b16 %v351, %v350
    %v415 = vpack.c.b16 %v353, %v352
    %v416 = vpack.c.b16 %v355, %v354
    %v417 = vpack.c.b16 %v357, %v356
    %v418 = vpack.c.b16 %v359, %v358
    %v419 = vpack.c.b16 %v361, %v360
    %v420 = vpack.c.b16 %v363, %v362
    %v421 = vpack.c.b16 %v365, %v364
    %v422 = vpack.c.b16 %v367, %v366
    %v423 = vpack.c.b16 %v369, %v368
    %v424 = vpack.c.b16 %v371, %v370
    %v425 = vpack.c.b16 %v373, %v372
    %v426 = vpack.c.b16 %v375, %v374
    %v427 = vpack.c.b16 %v377, %v376
    %v428 = vpack.c.b16 %v379, %v378
    %vm478 = vcmask 130048
    %v480 = vsel %vm478, %v78, 0
    %482 = vmatprep.subr.bf16.mxu0 0
    %483 = vmatpush1.bf16.msra.mxu0 %v380
    %484 = vmatprep.subr.bf16.mxu0 0
    %485 = vmatpush1.bf16.msra.mxu0 %v381
    %486 = vmatprep.subr.bf16.mxu0 0
    %487 = vmatpush1.bf16.msra.mxu0 %v382
    %488 = vmatprep.subr.bf16.mxu0 0
    %489 = vmatpush1.bf16.msra.mxu0 %v383
    %490 = vmatprep.subr.bf16.mxu0 0
    %491 = vmatpush1.bf16.msra.mxu0 %v384
    %492 = vmatprep.subr.bf16.mxu0 0
    %493 = vmatpush1.bf16.msra.mxu0 %v385
    %494 = vmatprep.subr.bf16.mxu0 0
    %495 = vmatpush1.bf16.msra.mxu0 %v386
    %496 = vmatprep.subr.bf16.mxu0 0
    %497 = vmatpush1.bf16.msra.mxu0 %v387
    %498 = vmatprep.subr.bf16.mxu0 0
    %499 = vmatpush1.bf16.msra.mxu0 %v388
    %500 = vmatprep.subr.bf16.mxu0 0
    %501 = vmatpush1.bf16.msra.mxu0 %v389
    %502 = vmatprep.subr.bf16.mxu0 0
    %503 = vmatpush1.bf16.msra.mxu0 %v390
    %504 = vmatprep.subr.bf16.mxu0 0
    %505 = vmatpush1.bf16.msra.mxu0 %v391
    %506 = vmatprep.subr.bf16.mxu0 0
    %507 = vmatpush1.bf16.msra.mxu0 %v392
    %508 = vmatprep.subr.bf16.mxu0 0
    %509 = vmatpush1.bf16.msra.mxu0 %v393
    %510 = vmatprep.subr.bf16.mxu0 0
    %511 = vmatpush1.bf16.msra.mxu0 %v394
    %512 = vmatprep.subr.bf16.mxu0 0
    %513 = vmatpush1.bf16.msra.mxu0 %v395
    %514 = vmatprep.mubr.bf16.mxu0 %v73
    %515 = vmatmul.mubr.bf16.gmra.mrb[0].mxu0 %v72
    %v516 = vpop.f32.mrb[0].mxu0
    %v517 = vadd.f32 %v182, %v516
    %v518 = vpop.f32.mrb[0].mxu0
    %v519 = vpop.f32.mrb[0].mxu0
    %v520 = vpop.f32.mrb[0].mxu0
    %521 = vdwg.mxu0
    %522 = vmatprep.subr.bf16.mxu0 0
    %523 = vmatpush1.bf16.msra.mxu0 %v396
    %524 = vmatprep.subr.bf16.mxu0 0
    %525 = vmatpush1.bf16.msra.mxu0 %v397
    %526 = vmatprep.subr.bf16.mxu0 0
    %527 = vmatpush1.bf16.msra.mxu0 %v398
    %528 = vmatprep.subr.bf16.mxu0 0
    %529 = vmatpush1.bf16.msra.mxu0 %v399
    %530 = vmatprep.subr.bf16.mxu0 0
    %531 = vmatpush1.bf16.msra.mxu0 %v400
    %532 = vmatprep.subr.bf16.mxu0 0
    %533 = vmatpush1.bf16.msra.mxu0 %v401
    %534 = vmatprep.subr.bf16.mxu0 0
    %535 = vmatpush1.bf16.msra.mxu0 %v402
    %536 = vmatprep.subr.bf16.mxu0 0
    %537 = vmatpush1.bf16.msra.mxu0 %v403
    %538 = vmatprep.subr.bf16.mxu0 0
    %539 = vmatpush1.bf16.msra.mxu0 %v404
    %540 = vmatprep.subr.bf16.mxu0 0
    %541 = vmatpush1.bf16.msra.mxu0 %v405
    %542 = vmatprep.subr.bf16.mxu0 0
    %543 = vmatpush1.bf16.msra.mxu0 %v406
    %544 = vmatprep.subr.bf16.mxu0 0
    %545 = vmatpush1.bf16.msra.mxu0 %v407
    %546 = vmatprep.subr.bf16.mxu0 0
    %547 = vmatpush1.bf16.msra.mxu0 %v408
    %548 = vmatprep.subr.bf16.mxu0 0
    %549 = vmatpush1.bf16.msra.mxu0 %v409
    %550 = vmatprep.subr.bf16.mxu0 0
    %551 = vmatpush1.bf16.msra.mxu0 %v410
    %552 = vmatprep.subr.bf16.mxu0 0
    %553 = vmatpush1.bf16.msra.mxu0 %v411
    %554 = vmatprep.mubr.bf16.mxu0 %v75
    %555 = vmatmul.mubr.bf16.gmra.mrb[0].mxu0 %v74
    %v556 = vpop.f32.mrb[0].mxu0
    %v557 = vadd.f32 %v517, %v556
    %v558 = vpop.f32.mrb[0].mxu0
    %v559 = vpop.f32.mrb[0].mxu0
    %v560 = vpop.f32.mrb[0].mxu0
    %561 = vdwg.mxu0
    %562 = vmatprep.subr.bf16.mxu0 0
    %563 = vmatpush1.bf16.msra.mxu0 %v412
    %564 = vmatprep.subr.bf16.mxu0 0
    %565 = vmatpush1.bf16.msra.mxu0 %v413
    %566 = vmatprep.subr.bf16.mxu0 0
    %567 = vmatpush1.bf16.msra.mxu0 %v414
    %568 = vmatprep.subr.bf16.mxu0 0
    %569 = vmatpush1.bf16.msra.mxu0 %v415
    %570 = vmatprep.subr.bf16.mxu0 0
    %571 = vmatpush1.bf16.msra.mxu0 %v416
    %572 = vmatprep.subr.bf16.mxu0 0
    %573 = vmatpush1.bf16.msra.mxu0 %v417
    %574 = vmatprep.subr.bf16.mxu0 0
    %575 = vmatpush1.bf16.msra.mxu0 %v418
    %576 = vmatprep.subr.bf16.mxu0 0
    %577 = vmatpush1.bf16.msra.mxu0 %v419
    %578 = vmatprep.subr.bf16.mxu0 0
    %579 = vmatpush1.bf16.msra.mxu0 %v420
    %580 = vmatprep.subr.bf16.mxu0 0
    %581 = vmatpush1.bf16.msra.mxu0 %v421
    %582 = vmatprep.subr.bf16.mxu0 0
    %583 = vmatpush1.bf16.msra.mxu0 %v422
    %584 = vmatprep.subr.bf16.mxu0 0
    %585 = vmatpush1.bf16.msra.mxu0 %v423
    %586 = vmatprep.subr.bf16.mxu0 0
    %587 = vmatpush1.bf16.msra.mxu0 %v424
    %588 = vmatprep.subr.bf16.mxu0 0
    %589 = vmatpush1.bf16.msra.mxu0 %v425
    %590 = vmatprep.subr.bf16.mxu0 0
    %591 = vmatpush1.bf16.msra.mxu0 %v426
    %592 = vmatprep.subr.bf16.mxu0 0
    %593 = vmatpush1.bf16.msra.mxu0 %v427
    %594 = vmatprep.mubr.bf16.mxu0 %v77
    %595 = vmatmul.mubr.bf16.gmra.mrb[0].mxu0 %v76
    %v596 = vpop.f32.mrb[0].mxu0
    %v597 = vadd.f32 %v557, %v596
    %v598 = vpop.f32.mrb[0].mxu0
    %v599 = vpop.f32.mrb[0].mxu0
    %v600 = vpop.f32.mrb[0].mxu0
    %601 = vdwg.mxu0
    %602 = vmatprep.subr.bf16.mxu0 0
    %603 = vmatpush1.bf16.msra.mxu0 %v428
    %604 = vmatprep.subr.bf16.mxu0 0
    %605 = vmatpush1.bf16.msra.mxu0 0
    %606 = vmatprep.subr.bf16.mxu0 0
    %607 = vmatpush1.bf16.msra.mxu0 0
    %608 = vmatprep.subr.bf16.mxu0 0
    %609 = vmatpush1.bf16.msra.mxu0 0
    %610 = vmatprep.subr.bf16.mxu0 0
    %611 = vmatpush1.bf16.msra.mxu0 0
    %612 = vmatprep.subr.bf16.mxu0 0
    %613 = vmatpush1.bf16.msra.mxu0 0
    %614 = vmatprep.subr.bf16.mxu0 0
    %615 = vmatpush1.bf16.msra.mxu0 0
    %616 = vmatprep.subr.bf16.mxu0 0
    %617 = vmatpush1.bf16.msra.mxu0 0
    %618 = vmatprep.subr.bf16.mxu0 0
    %619 = vmatpush1.bf16.msra.mxu0 0
    %620 = vmatprep.subr.bf16.mxu0 0
    %621 = vmatpush1.bf16.msra.mxu0 0
    %622 = vmatprep.subr.bf16.mxu0 0
    %623 = vmatpush1.bf16.msra.mxu0 0
    %624 = vmatprep.subr.bf16.mxu0 0
    %625 = vmatpush1.bf16.msra.mxu0 0
    %626 = vmatprep.subr.bf16.mxu0 0
    %627 = vmatpush1.bf16.msra.mxu0 0
    %628 = vmatprep.subr.bf16.mxu0 0
    %629 = vmatpush1.bf16.msra.mxu0 0
    %630 = vmatprep.subr.bf16.mxu0 0
    %631 = vmatpush1.bf16.msra.mxu0 0
    %632 = vmatprep.subr.bf16.mxu0 0
    %633 = vmatpush1.bf16.msra.mxu0 0
    %634 = vmatprep.mubr.bf16.mxu0 0
    %635 = vmatmul.mubr.bf16.gmra.mrb[0].mxu0 %v480
    %v636 = vpop.f32.mrb[0].mxu0
    %v637 = vadd.f32 %v597, %v636
    %v638 = vpop.f32.mrb[0].mxu0
    %v639 = vpop.f32.mrb[0].mxu0
    %v640 = vpop.f32.mrb[0].mxu0
    %641 = vdwg.mxu0
    %v642 = vmax.f32 %v637, 0.0
    %v643 = vpack.c.bf16 %v642, %v642
    %v644 = vld [vmem:[%s3] sm:$0xf]
    %v645 = vld [vmem:[%s3 + $0x4] sm:$0xf]
    %v646 = vld [vmem:[%s3 + $0x8] sm:$0xf]
    %v647 = vld [vmem:[%s3 + $0xc] sm:$0xf]
    %v648 = vld [vmem:[%s3 + $0x10] sm:$0xf]
    %v649 = vld [vmem:[%s3 + $0x14] sm:$0xf]
    %v650 = vld [vmem:[%s3 + $0x18] sm:$0xf]
    %v651 = vld [vmem:[%s3 + $0x1c] sm:$0xf]
    %v652 = vld [vmem:[%s3 + $0x20] sm:$0xf]
    %v653 = vld [vmem:[%s3 + $0x24] sm:$0xf]
    %v654 = vld [vmem:[%s3 + $0x28] sm:$0xf]
    %v655 = vld [vmem:[%s3 + $0x2c] sm:$0xf]
    %v656 = vld [vmem:[%s3 + $0x30] sm:$0xf]
    %v657 = vld [vmem:[%s3 + $0x34] sm:$0xf]
    %v658 = vld [vmem:[%s3 + $0x38] sm:$0xf]
    %v659 = vld [vmem:[%s3 + $0x3c] sm:$0xf]
    %v660 = vld [vmem:[%s4] sm:$0x1]
    %v662 = vlaneseq
    %v663 = vshrl.u32 %v662, 7
    %v664 = vsub.s32 0, %v663
    %v665 = vrot.slane %v660, %v664
    %v683 = vunpack.c.l.b16 %v644
    %v684 = vunpack.c.l.b16 %v645
    %v685 = vunpack.c.l.b16 %v646
    %v686 = vunpack.c.l.b16 %v647
    %v687 = vunpack.c.l.b16 %v648
    %v688 = vunpack.c.l.b16 %v649
    %v689 = vunpack.c.l.b16 %v650
    %v690 = vunpack.c.l.b16 %v651
    %v691 = vunpack.c.l.b16 %v652
    %v692 = vunpack.c.l.b16 %v653
    %v693 = vunpack.c.l.b16 %v654
    %v694 = vunpack.c.l.b16 %v655
    %v695 = vunpack.c.l.b16 %v656
    %v696 = vunpack.c.l.b16 %v657
    %v697 = vunpack.c.l.b16 %v658
    %v698 = vunpack.c.l.b16 %v659
    %v699 = vpack.c.b16 %v684, %v683
    %v700 = vpack.c.b16 %v686, %v685
    %v701 = vpack.c.b16 %v688, %v687
    %v702 = vpack.c.b16 %v690, %v689
    %v703 = vpack.c.b16 %v692, %v691
    %v704 = vpack.c.b16 %v694, %v693
    %v705 = vpack.c.b16 %v696, %v695
    %v706 = vpack.c.b16 %v698, %v697
    %715 = vmatprep.subr.bf16.mxu0 0
    %716 = vmatpush1.bf16.msra.mxu0 %v699
    %717 = vmatprep.subr.bf16.mxu0 0
    %718 = vmatpush1.bf16.msra.mxu0 %v700
    %719 = vmatprep.subr.bf16.mxu0 0
    %720 = vmatpush1.bf16.msra.mxu0 %v701
    %721 = vmatprep.subr.bf16.mxu0 0
    %722 = vmatpush1.bf16.msra.mxu0 %v702
    %723 = vmatprep.subr.bf16.mxu0 0
    %724 = vmatpush1.bf16.msra.mxu0 %v703
    %725 = vmatprep.subr.bf16.mxu0 0
    %726 = vmatpush1.bf16.msra.mxu0 %v704
    %727 = vmatprep.subr.bf16.mxu0 0
    %728 = vmatpush1.bf16.msra.mxu0 %v705
    %729 = vmatprep.subr.bf16.mxu0 0
    %730 = vmatpush1.bf16.msra.mxu0 %v706
    %731 = vmatprep.subr.bf16.mxu0 0
    %732 = vmatpush1.bf16.msra.mxu0 0
    %733 = vmatprep.subr.bf16.mxu0 0
    %734 = vmatpush1.bf16.msra.mxu0 0
    %735 = vmatprep.subr.bf16.mxu0 0
    %736 = vmatpush1.bf16.msra.mxu0 0
    %737 = vmatprep.subr.bf16.mxu0 0
    %738 = vmatpush1.bf16.msra.mxu0 0
    %739 = vmatprep.subr.bf16.mxu0 0
    %740 = vmatpush1.bf16.msra.mxu0 0
    %741 = vmatprep.subr.bf16.mxu0 0
    %742 = vmatpush1.bf16.msra.mxu0 0
    %743 = vmatprep.subr.bf16.mxu0 0
    %744 = vmatpush1.bf16.msra.mxu0 0
    %745 = vmatprep.subr.bf16.mxu0 0
    %746 = vmatpush1.bf16.msra.mxu0 0
    %747 = vmatprep.mubr.bf16.mxu0 0
    %748 = vmatmul.mubr.bf16.gmra.mrb[0].mxu0 %v643
    %v749 = vpop.f32.mrb[0].mxu0
    %v750 = vadd.f32 %v665, %v749
    %v751 = vpop.f32.mrb[0].mxu0
    %v752 = vpop.f32.mrb[0].mxu0
    %v753 = vpop.f32.mrb[0].mxu0
    %754 = vdwg.mxu0
    %v755 = vmax.f32 %v750, 0.0
    %v756 = vpack.c.bf16 %v755, %v755
    %v757 = vld [vmem:[%s5] sm:$0xf]
    %v758 = vld [vmem:[%s5 + $0x4] sm:$0xf]
    %v759 = vld [vmem:[%s5 + $0x8] sm:$0xf]
    %v760 = vld [vmem:[%s5 + $0xc] sm:$0xf]
    %v761 = vld [vmem:[%s6] sm:$0x1]
    %v763 = vlaneseq
    %v764 = vshrl.u32 %v763, 7
    %v765 = vsub.s32 0, %v764
    %v766 = vrot.slane %v761, %v765
    %v772 = vunpack.c.l.b16 %v757
    %v773 = vunpack.c.l.b16 %v758
    %v774 = vunpack.c.l.b16 %v759
    %v775 = vunpack.c.l.b16 %v760
    %v776 = vpack.c.b16 %v773, %v772
    %v777 = vpack.c.b16 %v775, %v774
    %vm780 = vcmask 261120
    %v782 = vsel %vm780, %v756, 0
    %784 = vmatprep.subr.bf16.mxu0 0
    %785 = vmatpush1.bf16.msra.mxu0 %v776
    %786 = vmatprep.subr.bf16.mxu0 0
    %787 = vmatpush1.bf16.msra.mxu0 %v777
    %788 = vmatprep.subr.bf16.mxu0 0
    %789 = vmatpush1.bf16.msra.mxu0 0
    %790 = vmatprep.subr.bf16.mxu0 0
    %791 = vmatpush1.bf16.msra.mxu0 0
    %792 = vmatprep.subr.bf16.mxu0 0
    %793 = vmatpush1.bf16.msra.mxu0 0
    %794 = vmatprep.subr.bf16.mxu0 0
    %795 = vmatpush1.bf16.msra.mxu0 0
    %796 = vmatprep.subr.bf16.mxu0 0
    %797 = vmatpush1.bf16.msra.mxu0 0
    %798 = vmatprep.subr.bf16.mxu0 0
    %799 = vmatpush1.bf16.msra.mxu0 0
    %800 = vmatprep.subr.bf16.mxu0 0
    %801 = vmatpush1.bf16.msra.mxu0 0
    %802 = vmatprep.subr.bf16.mxu0 0
    %803 = vmatpush1.bf16.msra.mxu0 0
    %804 = vmatprep.subr.bf16.mxu0 0
    %805 = vmatpush1.bf16.msra.mxu0 0
    %806 = vmatprep.subr.bf16.mxu0 0
    %807 = vmatpush1.bf16.msra.mxu0 0
    %808 = vmatprep.subr.bf16.mxu0 0
    %809 = vmatpush1.bf16.msra.mxu0 0
    %810 = vmatprep.subr.bf16.mxu0 0
    %811 = vmatpush1.bf16.msra.mxu0 0
    %812 = vmatprep.subr.bf16.mxu0 0
    %813 = vmatpush1.bf16.msra.mxu0 0
    %814 = vmatprep.subr.bf16.mxu0 0
    %815 = vmatpush1.bf16.msra.mxu0 0
    %816 = vmatprep.mubr.bf16.mxu0 0
    %817 = vmatmul.mubr.bf16.gmra.mrb[0].mxu0 %v782
    %v818 = vpop.f32.mrb[0].mxu0
    %v819 = vadd.f32 %v766, %v818
    %v820 = vpop.f32.mrb[0].mxu0
    %v821 = vpop.f32.mrb[0].mxu0
    %v822 = vpop.f32.mrb[0].mxu0
    %823 = vdwg.mxu0
    %v824 = vmax.f32 %v819, 0.0
    %v825 = vlaneseq
    %v826 = vand.u32 %v825, 127
    %vm827 = vcmp.ge.s32.totalorder %v826, 32
    %vm828 = vcmp.lt.s32.totalorder %v826, 96
    %vm829 = vmand %vm827, %vm828
    %v830 = vsel %vm829, 1, 0
    %vm831 = vcmp.eq.s32.totalorder %v830, 1
    %v832 = vsel %vm831, %v642, %v824
    %v833 = vpack.c.bf16 %v832, %v832
    %v834 = vld [vmem:[#allocation5] sm:$0xff]
    %v835 = vld [vmem:[#allocation5 + $0x8] sm:$0xff]
    %v836 = vld [vmem:[#allocation5 + $0x10] sm:$0xff]
    %v837 = vld [vmem:[#allocation5 + $0x18] sm:$0xff]
    %v838 = vld [vmem:[#allocation5 + $0x20] sm:$0xff]
    %v839 = vld [vmem:[#allocation5 + $0x28] sm:$0xff]
    %v840 = vld [vmem:[#allocation5 + $0x30] sm:$0xff]
    %v841 = vld [vmem:[#allocation5 + $0x38] sm:$0xff]
    %v842 = vld [vmem:[#allocation5 + $0x40] sm:$0xff]
    %v843 = vld [vmem:[#allocation5 + $0x48] sm:$0xff]
    %v844 = vld [vmem:[#allocation5 + $0x50] sm:$0xff]
    %v845 = vld [vmem:[#allocation5 + $0x58] sm:$0xff]
    %v846 = vld [vmem:[#allocation5 + $0x60] sm:$0xff]
    %v847 = vld [vmem:[#allocation5 + $0x68] sm:$0xff]
    %v848 = vld [vmem:[#allocation5 + $0x70] sm:$0xff]
    %v849 = vld [vmem:[#allocation5 + $0x78] sm:$0xff]
    %v850 = vld [vmem:[#allocation5 + $0x80] sm:$0xff]
    %v851 = vld [vmem:[#allocation5 + $0x88] sm:$0xff]
    %v852 = vld [vmem:[#allocation5 + $0x90] sm:$0xff]
    %v853 = vld [vmem:[#allocation5 + $0x98] sm:$0xff]
    %v854 = vld [vmem:[#allocation5 + $0xa0] sm:$0xff]
    %v855 = vld [vmem:[#allocation5 + $0xa8] sm:$0xff]
    %v856 = vld [vmem:[#allocation5 + $0xb0] sm:$0xff]
    %v857 = vld [vmem:[#allocation5 + $0xb8] sm:$0xff]
    %v858 = vld [vmem:[#allocation5 + $0xc0] sm:$0xff]
    %v859 = vld [vmem:[#allocation5 + $0xc8] sm:$0xff]
    %v860 = vld [vmem:[#allocation5 + $0xd0] sm:$0xff]
    %v861 = vld [vmem:[#allocation5 + $0xd8] sm:$0xff]
    %v862 = vld [vmem:[#allocation5 + $0xe0] sm:$0xff]
    %v863 = vld [vmem:[#allocation5 + $0xe8] sm:$0xff]
    %v864 = vld [vmem:[#allocation5 + $0xf0] sm:$0xff]
    %v865 = vld [vmem:[#allocation5 + $0xf8] sm:$0xff]
    %v866 = vld [vmem:[#allocation5 + $0x100] sm:$0xff]
    %v867 = vld [vmem:[#allocation5 + $0x108] sm:$0xff]
    %v868 = vld [vmem:[#allocation5 + $0x110] sm:$0xff]
    %v869 = vld [vmem:[#allocation5 + $0x118] sm:$0xff]
    %v870 = vld [vmem:[#allocation5 + $0x120] sm:$0xff]
    %v871 = vld [vmem:[#allocation5 + $0x128] sm:$0xff]
    %v872 = vld [vmem:[#allocation5 + $0x130] sm:$0xff]
    %v873 = vld [vmem:[#allocation5 + $0x138] sm:$0xff]
    %v874 = vld [vmem:[#allocation5 + $0x140] sm:$0xff]
    %v875 = vld [vmem:[#allocation5 + $0x148] sm:$0xff]
    %v876 = vld [vmem:[#allocation5 + $0x150] sm:$0xff]
    %v877 = vld [vmem:[#allocation5 + $0x158] sm:$0xff]
    %v878 = vld [vmem:[#allocation5 + $0x160] sm:$0xff]
    %v879 = vld [vmem:[#allocation5 + $0x168] sm:$0xff]
    %v880 = vld [vmem:[#allocation5 + $0x170] sm:$0xff]
    %v881 = vld [vmem:[#allocation5 + $0x178] sm:$0xff]
    %v882 = vld [vmem:[#allocation5 + $0x180] sm:$0xff]
    %v883 = vld [vmem:[#allocation5 + $0x188] sm:$0xff]
    %v884 = vld [vmem:[#allocation5 + $0x190] sm:$0xff]
    %v885 = vld [vmem:[#allocation5 + $0x198] sm:$0xff]
    %v886 = vld [vmem:[#allocation5 + $0x1a0] sm:$0xff]
    %v887 = vld [vmem:[#allocation5 + $0x1a8] sm:$0xff]
    %v888 = vld [vmem:[#allocation5 + $0x1b0] sm:$0xff]
    %v889 = vld [vmem:[#allocation5 + $0x1b8] sm:$0xff]
    %v890 = vld [vmem:[#allocation5 + $0x1c0] sm:$0xff]
    %v891 = vld [vmem:[#allocation5 + $0x1c8] sm:$0xff]
    %v892 = vld [vmem:[#allocation5 + $0x1d0] sm:$0xff]
    %v893 = vld [vmem:[#allocation5 + $0x1d8] sm:$0xff]
    %v894 = vld [vmem:[#allocation5 + $0x1e0] sm:$0xff]
    %v895 = vld [vmem:[#allocation5 + $0x1e8] sm:$0xff]
    %v896 = vld [vmem:[#allocation5 + $0x1f0] sm:$0xff]
    %v897 = vld [vmem:[#allocation5 + $0x1f8] sm:$0xff]
    %v898 = vld [vmem:[#allocation5 + $0x200] sm:$0xff]
    %v899 = vld [vmem:[#allocation5 + $0x208] sm:$0xff]
    %v900 = vld [vmem:[#allocation5 + $0x210] sm:$0xff]
    %v901 = vld [vmem:[#allocation5 + $0x218] sm:$0xff]
    %v902 = vld [vmem:[#allocation5 + $0x220] sm:$0xff]
    %v903 = vld [vmem:[#allocation5 + $0x228] sm:$0xff]
    %v904 = vld [vmem:[#allocation5 + $0x230] sm:$0xff]
    %v905 = vld [vmem:[#allocation5 + $0x238] sm:$0xff]
    %v906 = vld [vmem:[#allocation5 + $0x240] sm:$0xff]
    %v907 = vld [vmem:[#allocation5 + $0x248] sm:$0xff]
    %v908 = vld [vmem:[#allocation5 + $0x250] sm:$0xff]
    %v909 = vld [vmem:[#allocation5 + $0x258] sm:$0xff]
    %v910 = vld [vmem:[#allocation5 + $0x260] sm:$0xff]
    %v911 = vld [vmem:[#allocation5 + $0x268] sm:$0xff]
    %v912 = vld [vmem:[#allocation5 + $0x270] sm:$0xff]
    %v913 = vld [vmem:[#allocation5 + $0x278] sm:$0xff]
    %v914 = vld [vmem:[#allocation5 + $0x280] sm:$0xff]
    %v915 = vld [vmem:[#allocation5 + $0x288] sm:$0xff]
    %v916 = vld [vmem:[#allocation5 + $0x290] sm:$0xff]
    %v917 = vld [vmem:[#allocation5 + $0x298] sm:$0xff]
    %v918 = vld [vmem:[#allocation5 + $0x2a0] sm:$0xff]
    %v919 = vld [vmem:[#allocation5 + $0x2a8] sm:$0xff]
    %v920 = vld [vmem:[#allocation5 + $0x2b0] sm:$0xff]
    %v921 = vld [vmem:[#allocation5 + $0x2b8] sm:$0xff]
    %v922 = vld [vmem:[#allocation5 + $0x2c0] sm:$0xff]
    %v923 = vld [vmem:[#allocation5 + $0x2c8] sm:$0xff]
    %v924 = vld [vmem:[#allocation5 + $0x2d0] sm:$0xff]
    %v925 = vld [vmem:[#allocation5 + $0x2d8] sm:$0xff]
    %v926 = vld [vmem:[#allocation5 + $0x2e0] sm:$0xff]
    %v927 = vld [vmem:[#allocation5 + $0x2e8] sm:$0xff]
    %v928 = vld [vmem:[#allocation5 + $0x2f0] sm:$0xff]
    %v929 = vld [vmem:[#allocation5 + $0x2f8] sm:$0xff]
    %v930 = vld [vmem:[#allocation5 + $0x300] sm:$0xff]
    %v931 = vld [vmem:[#allocation5 + $0x308] sm:$0xff]
    %v932 = vld [vmem:[#allocation5 + $0x310] sm:$0xff]
    %v933 = vld [vmem:[#allocation5 + $0x318] sm:$0xff]
    %v934 = vld [vmem:[#allocation5 + $0x320] sm:$0xff]
    %v935 = vld [vmem:[#allocation5 + $0x328] sm:$0xff]
    %v936 = vld [vmem:[#allocation5 + $0x330] sm:$0xff]
    %v937 = vld [vmem:[#allocation5 + $0x338] sm:$0xff]
    %v938 = vld [vmem:[#allocation5 + $0x340] sm:$0xff]
    %v939 = vld [vmem:[#allocation5 + $0x348] sm:$0xff]
    %v940 = vld [vmem:[#allocation5 + $0x350] sm:$0xff]
    %v941 = vld [vmem:[#allocation5 + $0x358] sm:$0xff]
    %v942 = vld [vmem:[#allocation5 + $0x360] sm:$0xff]
    %v943 = vld [vmem:[#allocation5 + $0x368] sm:$0xff]
    %v944 = vld [vmem:[#allocation5 + $0x370] sm:$0xff]
    %v945 = vld [vmem:[#allocation5 + $0x378] sm:$0xff]
    %v946 = vld [vmem:[%s8] sm:$0xff]
    %v947 = vld [vmem:[%s8 + $0x8] sm:$0x3f]
    %v950 = vlaneseq
    %v951 = vshrl.u32 %v950, 7
    %v952 = vsub.s32 0, %v951
    %v953 = vrot.slane %v946, %v952
    %v954 = vlaneseq
    %v955 = vshrl.u32 %v954, 7
    %v956 = vsub.s32 1, %v955
    %v957 = vrot.slane %v946, %v956
    %v958 = vlaneseq
    %v959 = vshrl.u32 %v958, 7
    %v960 = vsub.s32 2, %v959
    %v961 = vrot.slane %v946, %v960
    %v962 = vlaneseq
    %v963 = vshrl.u32 %v962, 7
    %v964 = vsub.s32 3, %v963
    %v965 = vrot.slane %v946, %v964
    %v966 = vlaneseq
    %v967 = vshrl.u32 %v966, 7
    %v968 = vsub.s32 4, %v967
    %v969 = vrot.slane %v946, %v968
    %v970 = vlaneseq
    %v971 = vshrl.u32 %v970, 7
    %v972 = vsub.s32 5, %v971
    %v973 = vrot.slane %v946, %v972
    %v974 = vlaneseq
    %v975 = vshrl.u32 %v974, 7
    %v976 = vsub.s32 6, %v975
    %v977 = vrot.slane %v946, %v976
    %v978 = vlaneseq
    %v979 = vshrl.u32 %v978, 7
    %v980 = vsub.s32 7, %v979
    %v981 = vrot.slane %v946, %v980
    %v982 = vlaneseq
    %v983 = vshrl.u32 %v982, 7
    %v984 = vsub.s32 0, %v983
    %v985 = vrot.slane %v947, %v984
    %v986 = vlaneseq
    %v987 = vshrl.u32 %v986, 7
    %v988 = vsub.s32 1, %v987
    %v989 = vrot.slane %v947, %v988
    %v990 = vlaneseq
    %v991 = vshrl.u32 %v990, 7
    %v992 = vsub.s32 2, %v991
    %v993 = vrot.slane %v947, %v992
    %v994 = vlaneseq
    %v995 = vshrl.u32 %v994, 7
    %v996 = vsub.s32 3, %v995
    %v997 = vrot.slane %v947, %v996
    %v998 = vlaneseq
    %v999 = vshrl.u32 %v998, 7
    %v1000 = vsub.s32 4, %v999
    %v1001 = vrot.slane %v947, %v1000
    %v1002 = vlaneseq
    %v1003 = vshrl.u32 %v1002, 7
    %v1004 = vsub.s32 5, %v1003
    %v1005 = vrot.slane %v947, %v1004
    %v1132 = vunpack.c.l.b16 %v834
    %v1133 = vunpack.c.h.b16 %v834
    %v1134 = vunpack.c.l.b16 %v835
    %v1135 = vunpack.c.h.b16 %v835
    %v1136 = vunpack.c.l.b16 %v836
    %v1137 = vunpack.c.h.b16 %v836
    %v1138 = vunpack.c.l.b16 %v837
    %v1139 = vunpack.c.h.b16 %v837
    %v1140 = vunpack.c.l.b16 %v838
    %v1141 = vunpack.c.h.b16 %v838
    %v1142 = vunpack.c.l.b16 %v839
    %v1143 = vunpack.c.h.b16 %v839
    %v1144 = vunpack.c.l.b16 %v840
    %v1145 = vunpack.c.h.b16 %v840
    %v1146 = vunpack.c.l.b16 %v841
    %v1147 = vunpack.c.h.b16 %v841
    %v1148 = vunpack.c.l.b16 %v842
    %v1149 = vunpack.c.h.b16 %v842
    %v1150 = vunpack.c.l.b16 %v843
    %v1151 = vunpack.c.h.b16 %v843
    %v1152 = vunpack.c.l.b16 %v844
    %v1153 = vunpack.c.h.b16 %v844
    %v1154 = vunpack.c.l.b16 %v845
    %v1155 = vunpack.c.h.b16 %v845
    %v1156 = vunpack.c.l.b16 %v846
    %v1157 = vunpack.c.h.b16 %v846
    %v1158 = vunpack.c.l.b16 %v847
    %v1159 = vunpack.c.h.b16 %v847
    %v1160 = vunpack.c.l.b16 %v848
    %v1161 = vunpack.c.h.b16 %v848
    %v1162 = vunpack.c.l.b16 %v849
    %v1163 = vunpack.c.h.b16 %v849
    %v1164 = vunpack.c.l.b16 %v850
    %v1165 = vunpack.c.h.b16 %v850
    %v1166 = vunpack.c.l.b16 %v851
    %v1167 = vunpack.c.h.b16 %v851
    %v1168 = vunpack.c.l.b16 %v852
    %v1169 = vunpack.c.h.b16 %v852
    %v1170 = vunpack.c.l.b16 %v853
    %v1171 = vunpack.c.h.b16 %v853
    %v1172 = vunpack.c.l.b16 %v854
    %v1173 = vunpack.c.h.b16 %v854
    %v1174 = vunpack.c.l.b16 %v855
    %v1175 = vunpack.c.h.b16 %v855
    %v1176 = vunpack.c.l.b16 %v856
    %v1177 = vunpack.c.h.b16 %v856
    %v1178 = vunpack.c.l.b16 %v857
    %v1179 = vunpack.c.h.b16 %v857
    %v1180 = vunpack.c.l.b16 %v858
    %v1181 = vunpack.c.h.b16 %v858
    %v1182 = vunpack.c.l.b16 %v859
    %v1183 = vunpack.c.h.b16 %v859
    %v1184 = vunpack.c.l.b16 %v860
    %v1185 = vunpack.c.h.b16 %v860
    %v1186 = vunpack.c.l.b16 %v861
    %v1187 = vunpack.c.h.b16 %v861
    %v1188 = vunpack.c.l.b16 %v862
    %v1189 = vunpack.c.h.b16 %v862
    %v1190 = vunpack.c.l.b16 %v863
    %v1191 = vunpack.c.h.b16 %v863
    %v1192 = vunpack.c.l.b16 %v864
    %v1193 = vunpack.c.h.b16 %v864
    %v1194 = vunpack.c.l.b16 %v865
    %v1195 = vunpack.c.h.b16 %v865
    %v1196 = vunpack.c.l.b16 %v866
    %v1197 = vunpack.c.h.b16 %v866
    %v1198 = vunpack.c.l.b16 %v867
    %v1199 = vunpack.c.h.b16 %v867
    %v1200 = vunpack.c.l.b16 %v868
    %v1201 = vunpack.c.h.b16 %v868
    %v1202 = vunpack.c.l.b16 %v869
    %v1203 = vunpack.c.h.b16 %v869
    %v1204 = vunpack.c.l.b16 %v870
    %v1205 = vunpack.c.h.b16 %v870
    %v1206 = vunpack.c.l.b16 %v871
    %v1207 = vunpack.c.h.b16 %v871
    %v1208 = vunpack.c.l.b16 %v872
    %v1209 = vunpack.c.h.b16 %v872
    %v1210 = vunpack.c.l.b16 %v873
    %v1211 = vunpack.c.h.b16 %v873
    %v1212 = vunpack.c.l.b16 %v874
    %v1213 = vunpack.c.h.b16 %v874
    %v1214 = vunpack.c.l.b16 %v875
    %v1215 = vunpack.c.h.b16 %v875
    %v1216 = vunpack.c.l.b16 %v876
    %v1217 = vunpack.c.h.b16 %v876
    %v1218 = vunpack.c.l.b16 %v877
    %v1219 = vunpack.c.h.b16 %v877
    %v1220 = vunpack.c.l.b16 %v878
    %v1221 = vunpack.c.h.b16 %v878
    %v1222 = vunpack.c.l.b16 %v879
    %v1223 = vunpack.c.h.b16 %v879
    %v1224 = vunpack.c.l.b16 %v880
    %v1225 = vunpack.c.h.b16 %v880
    %v1226 = vunpack.c.l.b16 %v881
    %v1227 = vunpack.c.h.b16 %v881
    %v1228 = vunpack.c.l.b16 %v882
    %v1229 = vunpack.c.h.b16 %v882
    %v1230 = vunpack.c.l.b16 %v883
    %v1231 = vunpack.c.h.b16 %v883
    %v1232 = vunpack.c.l.b16 %v884
    %v1233 = vunpack.c.h.b16 %v884
    %v1234 = vunpack.c.l.b16 %v885
    %v1235 = vunpack.c.h.b16 %v885
    %v1236 = vunpack.c.l.b16 %v886
    %v1237 = vunpack.c.h.b16 %v886
    %v1238 = vunpack.c.l.b16 %v887
    %v1239 = vunpack.c.h.b16 %v887
    %v1240 = vunpack.c.l.b16 %v888
    %v1241 = vunpack.c.h.b16 %v888
    %v1242 = vunpack.c.l.b16 %v889
    %v1243 = vunpack.c.h.b16 %v889
    %v1244 = vunpack.c.l.b16 %v890
    %v1245 = vunpack.c.h.b16 %v890
    %v1246 = vunpack.c.l.b16 %v891
    %v1247 = vunpack.c.h.b16 %v891
    %v1248 = vunpack.c.l.b16 %v892
    %v1249 = vunpack.c.h.b16 %v892
    %v1250 = vunpack.c.l.b16 %v893
    %v1251 = vunpack.c.h.b16 %v893
    %v1252 = vunpack.c.l.b16 %v894
    %v1253 = vunpack.c.h.b16 %v894
    %v1254 = vunpack.c.l.b16 %v895
    %v1255 = vunpack.c.h.b16 %v895
    %v1256 = vunpack.c.l.b16 %v896
    %v1257 = vunpack.c.h.b16 %v896
    %v1258 = vunpack.c.l.b16 %v897
    %v1259 = vunpack.c.h.b16 %v897
    %v1260 = vunpack.c.l.b16 %v898
    %v1261 = vunpack.c.h.b16 %v898
    %v1262 = vunpack.c.l.b16 %v899
    %v1263 = vunpack.c.h.b16 %v899
    %v1264 = vunpack.c.l.b16 %v900
    %v1265 = vunpack.c.h.b16 %v900
    %v1266 = vunpack.c.l.b16 %v901
    %v1267 = vunpack.c.h.b16 %v901
    %v1268 = vunpack.c.l.b16 %v902
    %v1269 = vunpack.c.h.b16 %v902
    %v1270 = vunpack.c.l.b16 %v903
    %v1271 = vunpack.c.h.b16 %v903
    %v1272 = vunpack.c.l.b16 %v904
    %v1273 = vunpack.c.h.b16 %v904
    %v1274 = vunpack.c.l.b16 %v905
    %v1275 = vunpack.c.h.b16 %v905
    %v1276 = vunpack.c.l.b16 %v906
    %v1277 = vunpack.c.h.b16 %v906
    %v1278 = vunpack.c.l.b16 %v907
    %v1279 = vunpack.c.h.b16 %v907
    %v1280 = vunpack.c.l.b16 %v908
    %v1281 = vunpack.c.h.b16 %v908
    %v1282 = vunpack.c.l.b16 %v909
    %v1283 = vunpack.c.h.b16 %v909
    %v1284 = vunpack.c.l.b16 %v910
    %v1285 = vunpack.c.h.b16 %v910
    %v1286 = vunpack.c.l.b16 %v911
    %v1287 = vunpack.c.h.b16 %v911
    %v1288 = vunpack.c.l.b16 %v912
    %v1289 = vunpack.c.h.b16 %v912
    %v1290 = vunpack.c.l.b16 %v913
    %v1291 = vunpack.c.h.b16 %v913
    %v1292 = vunpack.c.l.b16 %v914
    %v1293 = vunpack.c.h.b16 %v914
    %v1294 = vunpack.c.l.b16 %v915
    %v1295 = vunpack.c.h.b16 %v915
    %v1296 = vunpack.c.l.b16 %v916
    %v1297 = vunpack.c.h.b16 %v916
    %v1298 = vunpack.c.l.b16 %v917
    %v1299 = vunpack.c.h.b16 %v917
    %v1300 = vunpack.c.l.b16 %v918
    %v1301 = vunpack.c.h.b16 %v918
    %v1302 = vunpack.c.l.b16 %v919
    %v1303 = vunpack.c.h.b16 %v919
    %v1304 = vunpack.c.l.b16 %v920
    %v1305 = vunpack.c.h.b16 %v920
    %v1306 = vunpack.c.l.b16 %v921
    %v1307 = vunpack.c.h.b16 %v921
    %v1308 = vunpack.c.l.b16 %v922
    %v1309 = vunpack.c.h.b16 %v922
    %v1310 = vunpack.c.l.b16 %v923
    %v1311 = vunpack.c.h.b16 %v923
    %v1312 = vunpack.c.l.b16 %v924
    %v1313 = vunpack.c.h.b16 %v924
    %v1314 = vunpack.c.l.b16 %v925
    %v1315 = vunpack.c.h.b16 %v925
    %v1316 = vunpack.c.l.b16 %v926
    %v1317 = vunpack.c.h.b16 %v926
    %v1318 = vunpack.c.l.b16 %v927
    %v1319 = vunpack.c.h.b16 %v927
    %v1320 = vunpack.c.l.b16 %v928
    %v1321 = vunpack.c.h.b16 %v928
    %v1322 = vunpack.c.l.b16 %v929
    %v1323 = vunpack.c.h.b16 %v929
    %v1324 = vunpack.c.l.b16 %v930
    %v1325 = vunpack.c.h.b16 %v930
    %v1326 = vunpack.c.l.b16 %v931
    %v1327 = vunpack.c.h.b16 %v931
    %v1328 = vunpack.c.l.b16 %v932
    %v1329 = vunpack.c.h.b16 %v932
    %v1330 = vunpack.c.l.b16 %v933
    %v1331 = vunpack.c.h.b16 %v933
    %v1332 = vunpack.c.l.b16 %v934
    %v1333 = vunpack.c.h.b16 %v934
    %v1334 = vunpack.c.l.b16 %v935
    %v1335 = vunpack.c.h.b16 %v935
    %v1336 = vunpack.c.l.b16 %v936
    %v1337 = vunpack.c.h.b16 %v936
    %v1338 = vunpack.c.l.b16 %v937
    %v1339 = vunpack.c.h.b16 %v937
    %v1340 = vunpack.c.l.b16 %v938
    %v1341 = vunpack.c.h.b16 %v938
    %v1342 = vunpack.c.l.b16 %v939
    %v1343 = vunpack.c.h.b16 %v939
    %v1344 = vunpack.c.l.b16 %v940
    %v1345 = vunpack.c.h.b16 %v940
    %v1346 = vunpack.c.l.b16 %v941
    %v1347 = vunpack.c.h.b16 %v941
    %v1348 = vunpack.c.l.b16 %v942
    %v1349 = vunpack.c.h.b16 %v942
    %v1350 = vunpack.c.l.b16 %v943
    %v1351 = vunpack.c.h.b16 %v943
    %v1352 = vunpack.c.l.b16 %v944
    %v1353 = vunpack.c.h.b16 %v944
    %v1354 = vunpack.c.l.b16 %v945
    %v1355 = vunpack.c.h.b16 %v945
    %v1356 = vpack.c.b16 %v1146, %v1132
    %v1357 = vpack.c.b16 %v1147, %v1133
    %v1358 = vpack.c.b16 %v1148, %v1134
    %v1359 = vpack.c.b16 %v1149, %v1135
    %v1360 = vpack.c.b16 %v1150, %v1136
    %v1361 = vpack.c.b16 %v1151, %v1137
    %v1362 = vpack.c.b16 %v1152, %v1138
    %v1363 = vpack.c.b16 %v1153, %v1139
    %v1364 = vpack.c.b16 %v1154, %v1140
    %v1365 = vpack.c.b16 %v1155, %v1141
    %v1366 = vpack.c.b16 %v1156, %v1142
    %v1367 = vpack.c.b16 %v1157, %v1143
    %v1368 = vpack.c.b16 %v1158, %v1144
    %v1369 = vpack.c.b16 %v1159, %v1145
    %v1370 = vpack.c.b16 %v1174, %v1160
    %v1371 = vpack.c.b16 %v1175, %v1161
    %v1372 = vpack.c.b16 %v1176, %v1162
    %v1373 = vpack.c.b16 %v1177, %v1163
    %v1374 = vpack.c.b16 %v1178, %v1164
    %v1375 = vpack.c.b16 %v1179, %v1165
    %v1376 = vpack.c.b16 %v1180, %v1166
    %v1377 = vpack.c.b16 %v1181, %v1167
    %v1378 = vpack.c.b16 %v1182, %v1168
    %v1379 = vpack.c.b16 %v1183, %v1169
    %v1380 = vpack.c.b16 %v1184, %v1170
    %v1381 = vpack.c.b16 %v1185, %v1171
    %v1382 = vpack.c.b16 %v1186, %v1172
    %v1383 = vpack.c.b16 %v1187, %v1173
    %v1384 = vpack.c.b16 %v1202, %v1188
    %v1385 = vpack.c.b16 %v1203, %v1189
    %v1386 = vpack.c.b16 %v1204, %v1190
    %v1387 = vpack.c.b16 %v1205, %v1191
    %v1388 = vpack.c.b16 %v1206, %v1192
    %v1389 = vpack.c.b16 %v1207, %v1193
    %v1390 = vpack.c.b16 %v1208, %v1194
    %v1391 = vpack.c.b16 %v1209, %v1195
    %v1392 = vpack.c.b16 %v1210, %v1196
    %v1393 = vpack.c.b16 %v1211, %v1197
    %v1394 = vpack.c.b16 %v1212, %v1198
    %v1395 = vpack.c.b16 %v1213, %v1199
    %v1396 = vpack.c.b16 %v1214, %v1200
    %v1397 = vpack.c.b16 %v1215, %v1201
    %v1398 = vpack.c.b16 %v1230, %v1216
    %v1399 = vpack.c.b16 %v1231, %v1217
    %v1400 = vpack.c.b16 %v1232, %v1218
    %v1401 = vpack.c.b16 %v1233, %v1219
    %v1402 = vpack.c.b16 %v1234, %v1220
    %v1403 = vpack.c.b16 %v1235, %v1221
    %v1404 = vpack.c.b16 %v1236, %v1222
    %v1405 = vpack.c.b16 %v1237, %v1223
    %v1406 = vpack.c.b16 %v1238, %v1224
    %v1407 = vpack.c.b16 %v1239, %v1225
    %v1408 = vpack.c.b16 %v1240, %v1226
    %v1409 = vpack.c.b16 %v1241, %v1227
    %v1410 = vpack.c.b16 %v1242, %v1228
    %v1411 = vpack.c.b16 %v1243, %v1229
    %v1412 = vpack.c.b16 %v1258, %v1244
    %v1413 = vpack.c.b16 %v1259, %v1245
    %v1414 = vpack.c.b16 %v1260, %v1246
    %v1415 = vpack.c.b16 %v1261, %v1247
    %v1416 = vpack.c.b16 %v1262, %v1248
    %v1417 = vpack.c.b16 %v1263, %v1249
    %v1418 = vpack.c.b16 %v1264, %v1250
    %v1419 = vpack.c.b16 %v1265, %v1251
    %v1420 = vpack.c.b16 %v1266, %v1252
    %v1421 = vpack.c.b16 %v1267, %v1253
    %v1422 = vpack.c.b16 %v1268, %v1254
    %v1423 = vpack.c.b16 %v1269, %v1255
    %v1424 = vpack.c.b16 %v1270, %v1256
    %v1425 = vpack.c.b16 %v1271, %v1257
    %v1426 = vpack.c.b16 %v1286, %v1272
    %v1427 = vpack.c.b16 %v1287, %v1273
    %v1428 = vpack.c.b16 %v1288, %v1274
    %v1429 = vpack.c.b16 %v1289, %v1275
    %v1430 = vpack.c.b16 %v1290, %v1276
    %v1431 = vpack.c.b16 %v1291, %v1277
    %v1432 = vpack.c.b16 %v1292, %v1278
    %v1433 = vpack.c.b16 %v1293, %v1279
    %v1434 = vpack.c.b16 %v1294, %v1280
    %v1435 = vpack.c.b16 %v1295, %v1281
    %v1436 = vpack.c.b16 %v1296, %v1282
    %v1437 = vpack.c.b16 %v1297, %v1283
    %v1438 = vpack.c.b16 %v1298, %v1284
    %v1439 = vpack.c.b16 %v1299, %v1285
    %v1440 = vpack.c.b16 %v1314, %v1300
    %v1441 = vpack.c.b16 %v1315, %v1301
    %v1442 = vpack.c.b16 %v1316, %v1302
    %v1443 = vpack.c.b16 %v1317, %v1303
    %v1444 = vpack.c.b16 %v1318, %v1304
    %v1445 = vpack.c.b16 %v1319, %v1305
    %v1446 = vpack.c.b16 %v1320, %v1306
    %v1447 = vpack.c.b16 %v1321, %v1307
    %v1448 = vpack.c.b16 %v1322, %v1308
    %v1449 = vpack.c.b16 %v1323, %v1309
    %v1450 = vpack.c.b16 %v1324, %v1310
    %v1451 = vpack.c.b16 %v1325, %v1311
    %v1452 = vpack.c.b16 %v1326, %v1312
    %v1453 = vpack.c.b16 %v1327, %v1313
    %v1454 = vpack.c.b16 %v1342, %v1328
    %v1455 = vpack.c.b16 %v1343, %v1329
    %v1456 = vpack.c.b16 %v1344, %v1330
    %v1457 = vpack.c.b16 %v1345, %v1331
    %v1458 = vpack.c.b16 %v1346, %v1332
    %v1459 = vpack.c.b16 %v1347, %v1333
    %v1460 = vpack.c.b16 %v1348, %v1334
    %v1461 = vpack.c.b16 %v1349, %v1335
    %v1462 = vpack.c.b16 %v1350, %v1336
    %v1463 = vpack.c.b16 %v1351, %v1337
    %v1464 = vpack.c.b16 %v1352, %v1338
    %v1465 = vpack.c.b16 %v1353, %v1339
    %v1466 = vpack.c.b16 %v1354, %v1340
    %v1467 = vpack.c.b16 %v1355, %v1341
    %1580 = vmatprep.subr.bf16.mxu0 %v1357
    %1581 = vmatpush1.bf16.msra.mxu0 %v1356
    %1582 = vmatprep.subr.bf16.mxu0 %v1371
    %1583 = vmatpush1.bf16.msra.mxu0 %v1370
    %1584 = vmatprep.subr.bf16.mxu0 %v1385
    %1585 = vmatpush1.bf16.msra.mxu0 %v1384
    %1586 = vmatprep.subr.bf16.mxu0 %v1399
    %1587 = vmatpush1.bf16.msra.mxu0 %v1398
    %1588 = vmatprep.subr.bf16.mxu0 %v1413
    %1589 = vmatpush1.bf16.msra.mxu0 %v1412
    %1590 = vmatprep.subr.bf16.mxu0 %v1427
    %1591 = vmatpush1.bf16.msra.mxu0 %v1426
    %1592 = vmatprep.subr.bf16.mxu0 %v1441
    %1593 = vmatpush1.bf16.msra.mxu0 %v1440
    %1594 = vmatprep.subr.bf16.mxu0 %v1455
    %1595 = vmatpush1.bf16.msra.mxu0 %v1454
    %1596 = vmatprep.subr.bf16.mxu0 0
    %1597 = vmatpush1.bf16.msra.mxu0 0
    %1598 = vmatprep.subr.bf16.mxu0 0
    %1599 = vmatpush1.bf16.msra.mxu0 0
    %1600 = vmatprep.subr.bf16.mxu0 0
    %1601 = vmatpush1.bf16.msra.mxu0 0
    %1602 = vmatprep.subr.bf16.mxu0 0
    %1603 = vmatpush1.bf16.msra.mxu0 0
    %1604 = vmatprep.subr.bf16.mxu0 0
    %1605 = vmatpush1.bf16.msra.mxu0 0
    %1606 = vmatprep.subr.bf16.mxu0 0
    %1607 = vmatpush1.bf16.msra.mxu0 0
    %1608 = vmatprep.subr.bf16.mxu0 0
    %1609 = vmatpush1.bf16.msra.mxu0 0
    %1610 = vmatprep.subr.bf16.mxu0 0
    %1611 = vmatpush1.bf16.msra.mxu0 0
    %1612 = vmatprep.mubr.bf16.mxu0 0
    %1613 = vmatmul.mubr.bf16.gmra.mrb[0].mxu0 %v833
    %v1614 = vpop.f32.mrb[0].mxu0
    %v1615 = vadd.f32 %v953, %v1614
    %v1616 = vpop.f32.mrb[0].mxu0
    %v1617 = vadd.f32 %v957, %v1616
    %v1618 = vpop.f32.mrb[0].mxu0
    %v1619 = vpop.f32.mrb[0].mxu0
    %1620 = vdwg.mxu0
    %1621 = vmatprep.subr.bf16.mxu0 %v1359
    %1622 = vmatpush1.bf16.msra.mxu0 %v1358
    %1623 = vmatprep.subr.bf16.mxu0 %v1373
    %1624 = vmatpush1.bf16.msra.mxu0 %v1372
    %1625 = vmatprep.subr.bf16.mxu0 %v1387
    %1626 = vmatpush1.bf16.msra.mxu0 %v1386
    %1627 = vmatprep.subr.bf16.mxu0 %v1401
    %1628 = vmatpush1.bf16.msra.mxu0 %v1400
    %1629 = vmatprep.subr.bf16.mxu0 %v1415
    %1630 = vmatpush1.bf16.msra.mxu0 %v1414
    %1631 = vmatprep.subr.bf16.mxu0 %v1429
    %1632 = vmatpush1.bf16.msra.mxu0 %v1428
    %1633 = vmatprep.subr.bf16.mxu0 %v1443
    %1634 = vmatpush1.bf16.msra.mxu0 %v1442
    %1635 = vmatprep.subr.bf16.mxu0 %v1457
    %1636 = vmatpush1.bf16.msra.mxu0 %v1456
    %1637 = vmatprep.subr.bf16.mxu0 0
    %1638 = vmatpush1.bf16.msra.mxu0 0
    %1639 = vmatprep.subr.bf16.mxu0 0
    %1640 = vmatpush1.bf16.msra.mxu0 0
    %1641 = vmatprep.subr.bf16.mxu0 0
    %1642 = vmatpush1.bf16.msra.mxu0 0
    %1643 = vmatprep.subr.bf16.mxu0 0
    %1644 = vmatpush1.bf16.msra.mxu0 0
    %1645 = vmatprep.subr.bf16.mxu0 0
    %1646 = vmatpush1.bf16.msra.mxu0 0
    %1647 = vmatprep.subr.bf16.mxu0 0
    %1648 = vmatpush1.bf16.msra.mxu0 0
    %1649 = vmatprep.subr.bf16.mxu0 0
    %1650 = vmatpush1.bf16.msra.mxu0 0
    %1651 = vmatprep.subr.bf16.mxu0 0
    %1652 = vmatpush1.bf16.msra.mxu0 0
    %1653 = vmatprep.mubr.bf16.mxu0 0
    %1654 = vmatmul.mubr.bf16.gmra.mrb[0].mxu0 %v833
    %v1655 = vpop.f32.mrb[0].mxu0
    %v1656 = vadd.f32 %v961, %v1655
    %v1657 = vpop.f32.mrb[0].mxu0
    %v1658 = vadd.f32 %v965, %v1657
    %v1659 = vpop.f32.mrb[0].mxu0
    %v1660 = vpop.f32.mrb[0].mxu0
    %1661 = vdwg.mxu0
    %1662 = vmatprep.subr.bf16.mxu0 %v1361
    %1663 = vmatpush1.bf16.msra.mxu0 %v1360
    %1664 = vmatprep.subr.bf16.mxu0 %v1375
    %1665 = vmatpush1.bf16.msra.mxu0 %v1374
    %1666 = vmatprep.subr.bf16.mxu0 %v1389
    %1667 = vmatpush1.bf16.msra.mxu0 %v1388
    %1668 = vmatprep.subr.bf16.mxu0 %v1403
    %1669 = vmatpush1.bf16.msra.mxu0 %v1402
    %1670 = vmatprep.subr.bf16.mxu0 %v1417
    %1671 = vmatpush1.bf16.msra.mxu0 %v1416
    %1672 = vmatprep.subr.bf16.mxu0 %v1431
    %1673 = vmatpush1.bf16.msra.mxu0 %v1430
    %1674 = vmatprep.subr.bf16.mxu0 %v1445
    %1675 = vmatpush1.bf16.msra.mxu0 %v1444
    %1676 = vmatprep.subr.bf16.mxu0 %v1459
    %1677 = vmatpush1.bf16.msra.mxu0 %v1458
    %1678 = vmatprep.subr.bf16.mxu0 0
    %1679 = vmatpush1.bf16.msra.mxu0 0
    %1680 = vmatprep.subr.bf16.mxu0 0
    %1681 = vmatpush1.bf16.msra.mxu0 0
    %1682 = vmatprep.subr.bf16.mxu0 0
    %1683 = vmatpush1.bf16.msra.mxu0 0
    %1684 = vmatprep.subr.bf16.mxu0 0
    %1685 = vmatpush1.bf16.msra.mxu0 0
    %1686 = vmatprep.subr.bf16.mxu0 0
    %1687 = vmatpush1.bf16.msra.mxu0 0
    %1688 = vmatprep.subr.bf16.mxu0 0
    %1689 = vmatpush1.bf16.msra.mxu0 0
    %1690 = vmatprep.subr.bf16.mxu0 0
    %1691 = vmatpush1.bf16.msra.mxu0 0
    %1692 = vmatprep.subr.bf16.mxu0 0
    %1693 = vmatpush1.bf16.msra.mxu0 0
    %1694 = vmatprep.mubr.bf16.mxu0 0
    %1695 = vmatmul.mubr.bf16.gmra.mrb[0].mxu0 %v833
    %v1696 = vpop.f32.mrb[0].mxu0
    %v1697 = vadd.f32 %v969, %v1696
    %v1698 = vpop.f32.mrb[0].mxu0
    %v1699 = vadd.f32 %v973, %v1698
    %v1700 = vpop.f32.mrb[0].mxu0
    %v1701 = vpop.f32.mrb[0].mxu0
    %1702 = vdwg.mxu0
    %1703 = vmatprep.subr.bf16.mxu0 %v1363
    %1704 = vmatpush1.bf16.msra.mxu0 %v1362
    %1705 = vmatprep.subr.bf16.mxu0 %v1377
    %1706 = vmatpush1.bf16.msra.mxu0 %v1376
    %1707 = vmatprep.subr.bf16.mxu0 %v1391
    %1708 = vmatpush1.bf16.msra.mxu0 %v1390
    %1709 = vmatprep.subr.bf16.mxu0 %v1405
    %1710 = vmatpush1.bf16.msra.mxu0 %v1404
    %1711 = vmatprep.subr.bf16.mxu0 %v1419
    %1712 = vmatpush1.bf16.msra.mxu0 %v1418
    %1713 = vmatprep.subr.bf16.mxu0 %v1433
    %1714 = vmatpush1.bf16.msra.mxu0 %v1432
    %1715 = vmatprep.subr.bf16.mxu0 %v1447
    %1716 = vmatpush1.bf16.msra.mxu0 %v1446
    %1717 = vmatprep.subr.bf16.mxu0 %v1461
    %1718 = vmatpush1.bf16.msra.mxu0 %v1460
    %1719 = vmatprep.subr.bf16.mxu0 0
    %1720 = vmatpush1.bf16.msra.mxu0 0
    %1721 = vmatprep.subr.bf16.mxu0 0
    %1722 = vmatpush1.bf16.msra.mxu0 0
    %1723 = vmatprep.subr.bf16.mxu0 0
    %1724 = vmatpush1.bf16.msra.mxu0 0
    %1725 = vmatprep.subr.bf16.mxu0 0
    %1726 = vmatpush1.bf16.msra.mxu0 0
    %1727 = vmatprep.subr.bf16.mxu0 0
    %1728 = vmatpush1.bf16.msra.mxu0 0
    %1729 = vmatprep.subr.bf16.mxu0 0
    %1730 = vmatpush1.bf16.msra.mxu0 0
    %1731 = vmatprep.subr.bf16.mxu0 0
    %1732 = vmatpush1.bf16.msra.mxu0 0
    %1733 = vmatprep.subr.bf16.mxu0 0
    %1734 = vmatpush1.bf16.msra.mxu0 0
    %1735 = vmatprep.mubr.bf16.mxu0 0
    %1736 = vmatmul.mubr.bf16.gmra.mrb[0].mxu0 %v833
    %v1737 = vpop.f32.mrb[0].mxu0
    %v1738 = vadd.f32 %v977, %v1737
    %v1739 = vpop.f32.mrb[0].mxu0
    %v1740 = vadd.f32 %v981, %v1739
    %v1741 = vpop.f32.mrb[0].mxu0
    %v1742 = vpop.f32.mrb[0].mxu0
    %1743 = vdwg.mxu0
    %1744 = vmatprep.subr.bf16.mxu0 %v1365
    %1745 = vmatpush1.bf16.msra.mxu0 %v1364
    %1746 = vmatprep.subr.bf16.mxu0 %v1379
    %1747 = vmatpush1.bf16.msra.mxu0 %v1378
    %1748 = vmatprep.subr.bf16.mxu0 %v1393
    %1749 = vmatpush1.bf16.msra.mxu0 %v1392
    %1750 = vmatprep.subr.bf16.mxu0 %v1407
    %1751 = vmatpush1.bf16.msra.mxu0 %v1406
    %1752 = vmatprep.subr.bf16.mxu0 %v1421
    %1753 = vmatpush1.bf16.msra.mxu0 %v1420
    %1754 = vmatprep.subr.bf16.mxu0 %v1435
    %1755 = vmatpush1.bf16.msra.mxu0 %v1434
    %1756 = vmatprep.subr.bf16.mxu0 %v1449
    %1757 = vmatpush1.bf16.msra.mxu0 %v1448
    %1758 = vmatprep.subr.bf16.mxu0 %v1463
    %1759 = vmatpush1.bf16.msra.mxu0 %v1462
    %1760 = vmatprep.subr.bf16.mxu0 0
    %1761 = vmatpush1.bf16.msra.mxu0 0
    %1762 = vmatprep.subr.bf16.mxu0 0
    %1763 = vmatpush1.bf16.msra.mxu0 0
    %1764 = vmatprep.subr.bf16.mxu0 0
    %1765 = vmatpush1.bf16.msra.mxu0 0
    %1766 = vmatprep.subr.bf16.mxu0 0
    %1767 = vmatpush1.bf16.msra.mxu0 0
    %1768 = vmatprep.subr.bf16.mxu0 0
    %1769 = vmatpush1.bf16.msra.mxu0 0
    %1770 = vmatprep.subr.bf16.mxu0 0
    %1771 = vmatpush1.bf16.msra.mxu0 0
    %1772 = vmatprep.subr.bf16.mxu0 0
    %1773 = vmatpush1.bf16.msra.mxu0 0
    %1774 = vmatprep.subr.bf16.mxu0 0
    %1775 = vmatpush1.bf16.msra.mxu0 0
    %1776 = vmatprep.mubr.bf16.mxu0 0
    %1777 = vmatmul.mubr.bf16.gmra.mrb[0].mxu0 %v833
    %v1778 = vpop.f32.mrb[0].mxu0
    %v1779 = vadd.f32 %v985, %v1778
    %v1780 = vpop.f32.mrb[0].mxu0
    %v1781 = vadd.f32 %v989, %v1780
    %v1782 = vpop.f32.mrb[0].mxu0
    %v1783 = vpop.f32.mrb[0].mxu0
    %1784 = vdwg.mxu0
    %1785 = vmatprep.subr.bf16.mxu0 %v1367
    %1786 = vmatpush1.bf16.msra.mxu0 %v1366
    %1787 = vmatprep.subr.bf16.mxu0 %v1381
    %1788 = vmatpush1.bf16.msra.mxu0 %v1380
    %1789 = vmatprep.subr.bf16.mxu0 %v1395
    %1790 = vmatpush1.bf16.msra.mxu0 %v1394
    %1791 = vmatprep.subr.bf16.mxu0 %v1409
    %1792 = vmatpush1.bf16.msra.mxu0 %v1408
    %1793 = vmatprep.subr.bf16.mxu0 %v1423
    %1794 = vmatpush1.bf16.msra.mxu0 %v1422
    %1795 = vmatprep.subr.bf16.mxu0 %v1437
    %1796 = vmatpush1.bf16.msra.mxu0 %v1436
    %1797 = vmatprep.subr.bf16.mxu0 %v1451
    %1798 = vmatpush1.bf16.msra.mxu0 %v1450
    %1799 = vmatprep.subr.bf16.mxu0 %v1465
    %1800 = vmatpush1.bf16.msra.mxu0 %v1464
    %1801 = vmatprep.subr.bf16.mxu0 0
    %1802 = vmatpush1.bf16.msra.mxu0 0
    %1803 = vmatprep.subr.bf16.mxu0 0
    %1804 = vmatpush1.bf16.msra.mxu0 0
    %1805 = vmatprep.subr.bf16.mxu0 0
    %1806 = vmatpush1.bf16.msra.mxu0 0
    %1807 = vmatprep.subr.bf16.mxu0 0
    %1808 = vmatpush1.bf16.msra.mxu0 0
    %1809 = vmatprep.subr.bf16.mxu0 0
    %1810 = vmatpush1.bf16.msra.mxu0 0
    %1811 = vmatprep.subr.bf16.mxu0 0
    %1812 = vmatpush1.bf16.msra.mxu0 0
    %1813 = vmatprep.subr.bf16.mxu0 0
    %1814 = vmatpush1.bf16.msra.mxu0 0
    %1815 = vmatprep.subr.bf16.mxu0 0
    %1816 = vmatpush1.bf16.msra.mxu0 0
    %1817 = vmatprep.mubr.bf16.mxu0 0
    %1818 = vmatmul.mubr.bf16.gmra.mrb[0].mxu0 %v833
    %v1819 = vpop.f32.mrb[0].mxu0
    %v1820 = vadd.f32 %v993, %v1819
    %v1821 = vpop.f32.mrb[0].mxu0
    %v1822 = vadd.f32 %v997, %v1821
    %v1823 = vpop.f32.mrb[0].mxu0
    %v1824 = vpop.f32.mrb[0].mxu0
    %1825 = vdwg.mxu0
    %1826 = vmatprep.subr.bf16.mxu0 %v1369
    %1827 = vmatpush1.bf16.msra.mxu0 %v1368
    %1828 = vmatprep.subr.bf16.mxu0 %v1383
    %1829 = vmatpush1.bf16.msra.mxu0 %v1382
    %1830 = vmatprep.subr.bf16.mxu0 %v1397
    %1831 = vmatpush1.bf16.msra.mxu0 %v1396
    %1832 = vmatprep.subr.bf16.mxu0 %v1411
    %1833 = vmatpush1.bf16.msra.mxu0 %v1410
    %1834 = vmatprep.subr.bf16.mxu0 %v1425
    %1835 = vmatpush1.bf16.msra.mxu0 %v1424
    %1836 = vmatprep.subr.bf16.mxu0 %v1439
    %1837 = vmatpush1.bf16.msra.mxu0 %v1438
    %1838 = vmatprep.subr.bf16.mxu0 %v1453
    %1839 = vmatpush1.bf16.msra.mxu0 %v1452
    %1840 = vmatprep.subr.bf16.mxu0 %v1467
    %1841 = vmatpush1.bf16.msra.mxu0 %v1466
    %1842 = vmatprep.subr.bf16.mxu0 0
    %1843 = vmatpush1.bf16.msra.mxu0 0
    %1844 = vmatprep.subr.bf16.mxu0 0
    %1845 = vmatpush1.bf16.msra.mxu0 0
    %1846 = vmatprep.subr.bf16.mxu0 0
    %1847 = vmatpush1.bf16.msra.mxu0 0
    %1848 = vmatprep.subr.bf16.mxu0 0
    %1849 = vmatpush1.bf16.msra.mxu0 0
    %1850 = vmatprep.subr.bf16.mxu0 0
    %1851 = vmatpush1.bf16.msra.mxu0 0
    %1852 = vmatprep.subr.bf16.mxu0 0
    %1853 = vmatpush1.bf16.msra.mxu0 0
    %1854 = vmatprep.subr.bf16.mxu0 0
    %1855 = vmatpush1.bf16.msra.mxu0 0
    %1856 = vmatprep.subr.bf16.mxu0 0
    %1857 = vmatpush1.bf16.msra.mxu0 0
    %1858 = vmatprep.mubr.bf16.mxu0 0
    %1859 = vmatmul.mubr.bf16.gmra.mrb[0].mxu0 %v833
    %v1860 = vpop.f32.mrb[0].mxu0
    %v1861 = vadd.f32 %v1001, %v1860
    %v1862 = vpop.f32.mrb[0].mxu0
    %v1863 = vadd.f32 %v1005, %v1862
    %v1864 = vpop.f32.mrb[0].mxu0
    %v1865 = vpop.f32.mrb[0].mxu0
    %1866 = vdwg.mxu0
    %v1867 = vmax.f32 %v1615, 0.0
    %v1868 = vmax.f32 %v1617, 0.0
    %v1869 = vmax.f32 %v1656, 0.0
    %v1870 = vmax.f32 %v1658, 0.0
    %v1871 = vmax.f32 %v1697, 0.0
    %v1872 = vmax.f32 %v1699, 0.0
    %v1873 = vmax.f32 %v1738, 0.0
    %v1874 = vmax.f32 %v1740, 0.0
    %v1875 = vmax.f32 %v1779, 0.0
    %v1876 = vmax.f32 %v1781, 0.0
    %v1877 = vmax.f32 %v1820, 0.0
    %v1878 = vmax.f32 %v1822, 0.0
    %v1879 = vmax.f32 %v1861, 0.0
    %v1880 = vmax.f32 %v1863, 0.0
    %1881 = vst [vmem:[#allocation7] sm:$0xff] %v1867
    %1882 = vst [vmem:[#allocation7 + $0x8] sm:$0xff] %v1868
    %1883 = vst [vmem:[#allocation7 + $0x10] sm:$0xff] %v1869
    %1884 = vst [vmem:[#allocation7 + $0x18] sm:$0xff] %v1870
    %1885 = vst [vmem:[#allocation7 + $0x20] sm:$0xff] %v1871
    %1886 = vst [vmem:[#allocation7 + $0x28] sm:$0xff] %v1872
    %1887 = vst.msk [vmem:[#allocation7 + $0x30] sm:$0xff] %vm478, %v1873
    %1888 = vst [vmem:[#allocation8] sm:$0xff] %v1874
    %1889 = vst [vmem:[#allocation8 + $0x8] sm:$0xff] %v1875
    %1890 = vst [vmem:[#allocation8 + $0x10] sm:$0xff] %v1876
    %1891 = vst [vmem:[#allocation8 + $0x18] sm:$0xff] %v1877
    %1892 = vst [vmem:[#allocation8 + $0x20] sm:$0xff] %v1878
    %1893 = vst [vmem:[#allocation8 + $0x28] sm:$0xff] %v1879
    %1894 = vst.msk [vmem:[#allocation8 + $0x30] sm:$0xff] %vm478, %v1880
    // Predicated region
    $region46: #{tpu_custom_call.1} parent=1 // pred_check
      _
    $region47: #{tpu_custom_call.1} parent=1 // pred_check_branch
      %1896 = sbr.rel (0) target = $region49
    $region48: #{tpu_custom_call.1} parent=1 // pred_region
      %s1898 = ssub.s32 896, 896
      %1899 = vsyncadd [#allocation4], %s1898
      %s1901 = sshll.u32 [#allocation7], 4
      %s1902 = int_to_ptr.vmem [resolvable:$true] %s1901
      %1904 = dma.vmem_to_hbm [thread:$0]  %s1902, 896, %s9, [#allocation4]
    $region49: #{tpu_custom_call.1} parent=1 // pred_fallthru
      _
    // Predicated region
    $region50: #{tpu_custom_call.1} parent=1 // pred_check
      _
    $region51: #{tpu_custom_call.1} parent=1 // pred_check_branch
      %1906 = sbr.rel (0) target = $region53
    $region52: #{tpu_custom_call.1} parent=1 // pred_region
      %s1908 = ssub.s32 896, 896
      %1909 = vsyncadd [#allocation9], %s1908
      %s1911 = sshll.u32 [#allocation8], 4
      %s1912 = int_to_ptr.vmem [resolvable:$true] %s1911
      %1914 = dma.vmem_to_hbm [thread:$0]  %s1912, 896, %s10, [#allocation9]
    $region53: #{tpu_custom_call.1} parent=1 // pred_fallthru
      _
    // Predicated region
    $region54: #{tpu_custom_call.1} parent=1 // pred_check
      _
    $region55: #{tpu_custom_call.1} parent=1 // pred_check_branch
      %1916 = sbr.rel (0) target = $region57
    $region56: #{tpu_custom_call.1} parent=1 // pred_region
      %1917 = dma.done [#allocation4], 896
    $region57: #{tpu_custom_call.1} parent=1 // pred_fallthru
      _
    // Predicated region
    $region58: #{tpu_custom_call.1} parent=1 // pred_check
      _
    $region59: #{tpu_custom_call.1} parent=1 // pred_check_branch
      %1919 = sbr.rel (0) target = $region61
    $region60: #{tpu_custom_call.1} parent=1 // pred_region
      %1920 = dma.done [#allocation9], 896
    $region61: #{tpu_custom_call.1} parent=1 // pred_fallthru
      _
    %1921 = vsyncpa [#allocation3], 1
    %1922 = vsyncpa [#allocation6], 1
    %1923 = vsyncpa [#allocation4], 1
    %1924 = vsyncpa [#allocation9], 1

</llo_original>
